<compile_context>
chip_gen: v7x
topology: tpu7x:2x2x1
jax: 0.10.0
libtpu: 0.0.40
codegen_flags: <defaults>
</compile_context>

<pallas_src>
import math
import jax
import jax.numpy as jnp
from jax import lax
from jax.experimental import pallas as pl
from jax.experimental.pallas import tpu as pltpu


def varnn_kernel(emb_seq_ref,   # (S, B, E) f32  input-token embeddings, time-major
                 emb_tbl_ref,   # (V, E)    f32  argmax-feedback embedding rows
                 w_gates_ref,   # (2E+H,4H) bf16 fused [W_ih.T ; W_hh.T]
                 b_gates_ref,   # (1, 4H)   f32  b_ih + b_hh
                 w_lin_ref,     # (H, V)    bf16
                 b_lin_ref,     # (1, V)    f32
                 h0_ref,        # (B, H)    f32
                 c0_ref,        # (B, H)    f32
                 out_ref):      # (B, V)    f32  last-step logits
    S = emb_seq_ref.shape[0]
    B, H = h0_ref.shape
    V, E = emb_tbl_ref.shape

    # Loop-invariant operands: load once, keep live across the (unrolled) loop.
    w_gates = w_gates_ref[...]
    b_gates = b_gates_ref[...]
    w_lin = w_lin_ref[...]
    b_lin = b_lin_ref[...]
    emb_tbl = emb_tbl_ref[...]

    # Lane mask: lanes [2H, 3H) carry the "g" gate (tanh); the rest sigmoid.
    lane = lax.broadcasted_iota(jnp.int32, (B, 4 * H), 1)
    g_mask = jnp.logical_and(lane >= 2 * H, lane < 3 * H)
    col_ids = lax.broadcasted_iota(jnp.int32, (B, V), 1)

    def step(t, carry):
        h, c, prev, _ = carry
        emb_t = emb_seq_ref[t]                                     # (B, E)

        # Fused LSTMCell gates: single MXU push over K = 2E + H, bias added
        # as one full-vreg VPU add.
        x_cat = jnp.concatenate([prev, emb_t, h], axis=1)          # (B, 2E+H)
        gates = jnp.dot(x_cat.astype(jnp.bfloat16), w_gates,
                        preferred_element_type=jnp.float32) + b_gates  # (B,4H)

        # Full-vreg activations (2 EUP passes total), blended by lane mask.
        sig = jax.nn.sigmoid(gates)
        th = jnp.tanh(gates)
        act = jnp.where(g_mask, th, sig)                           # sig(i)|sig(f)|tanh(g)|sig(o)
        i_a = act[:, 0:H]
        f_a = act[:, H:2 * H]
        g_a = act[:, 2 * H:3 * H]
        o_a = act[:, 3 * H:4 * H]

        c_new = f_a * c + i_a * g_a
        h_new = o_a * jnp.tanh(c_new)

        # Linear head (needed every step: it drives the argmax feedback).
        logits = jnp.dot(h_new.astype(jnp.bfloat16), w_lin,
                         preferred_element_type=jnp.float32) + b_lin    # (B, V)

        # previous = embedding[argmax(logits, dim=1)]  (first-max index on
        # ties), implemented as an exact one-hot @ table matmul.
        max_val = jnp.max(logits, axis=1, keepdims=True)
        masked_ids = jnp.where(logits == max_val, col_ids, V)
        idx = jnp.min(masked_ids, axis=1, keepdims=True)           # (B, 1)
        onehot = (col_ids == idx).astype(jnp.float32)              # (B, V)
        prev_new = jnp.dot(onehot, emb_tbl,
                           preferred_element_type=jnp.float32)     # (B, E)
        return h_new, c_new, prev_new, logits

    init = (h0_ref[...], c0_ref[...],
            jnp.zeros((B, E), jnp.float32), jnp.zeros((B, V), jnp.float32))
    _, _, _, logits_last = lax.fori_loop(0, S, step, init, unroll=True)
    out_ref[...] = logits_last      # single write: last step only


def varnn_forward(sequence, params, h0, c0):
    """sequence: (B, S) int32 token ids in [0, num_embeddings]."""
    emb_full = params["embedding"].astype(jnp.float32)   # (V+1, E), padding row zero
    w_ih = params["w_ih"]                                # (4H, 2E)
    w_hh = params["w_hh"]                                # (4H, H)
    b_ih = params["b_ih"]                                # (4H,)
    b_hh = params["b_hh"]                                # (4H,)
    w_lin = params["w_lin"]                              # (V, H)
    b_lin = params["b_lin"]                              # (V,)

    B, S = sequence.shape
    Vp1, E = emb_full.shape
    V = Vp1 - 1
    H = w_hh.shape[1]

    # One small XLA gather for the input-token embeddings, time-major layout
    # (S, B, E); the kernel holds the whole thing resident in VMEM (no
    # per-step DMAs).
    emb_seq = jnp.take(emb_full, sequence.T, axis=0).astype(jnp.float32)

    # Fused gate weight: [prev | emb_t | h] @ w_gates reproduces
    # x @ W_ih.T + h @ W_hh.T in a single matmul (K = 2E + H).
    w_gates = jnp.concatenate([w_ih.T, w_hh.T], axis=0).astype(jnp.bfloat16)
    b_gates = (b_ih + b_hh).reshape(1, 4 * H).astype(jnp.float32)
    w_lin_t = w_lin.T.astype(jnp.bfloat16)               # (H, V)
    b_lin2 = b_lin.reshape(1, V).astype(jnp.float32)
    emb_tbl = emb_full[:V]                                # argmax range excludes padding row

    vmem_specs = [pl.BlockSpec(memory_space=pltpu.MemorySpace.VMEM)
                  for _ in range(8)]

    return pl.pallas_call(
        varnn_kernel,
        out_shape=jax.ShapeDtypeStruct((B, V), jnp.float32),
        in_specs=vmem_specs,
        out_specs=pl.BlockSpec(memory_space=pltpu.MemorySpace.VMEM),
    )(emb_seq, emb_tbl, w_gates, b_gates, w_lin_t, b_lin2,
      h0.astype(jnp.float32), c0.astype(jnp.float32))


def init_params(key, num_embeddings, embedding_dim, hidden_size, padding_idx):
    V, E, H = num_embeddings, embedding_dim, hidden_size
    ks = jax.random.split(key, 7)
    # nn.Embedding: N(0,1), padding row zeroed.
    emb = jax.random.normal(ks[0], (V + 1, E), jnp.float32)
    emb = emb.at[padding_idx].set(0.0)
    # nn.LSTMCell: U(-1/sqrt(H), 1/sqrt(H)) for weights and biases.
    k = 1.0 / math.sqrt(H)
    w_ih = jax.random.uniform(ks[1], (4 * H, 2 * E), jnp.float32, -k, k)
    w_hh = jax.random.uniform(ks[2], (4 * H, H), jnp.float32, -k, k)
    b_ih = jax.random.uniform(ks[3], (4 * H,), jnp.float32, -k, k)
    b_hh = jax.random.uniform(ks[4], (4 * H,), jnp.float32, -k, k)
    # nn.Linear(H, V): U(-1/sqrt(H), 1/sqrt(H)).
    w_lin = jax.random.uniform(ks[5], (V, H), jnp.float32, -k, k)
    b_lin = jax.random.uniform(ks[6], (V,), jnp.float32, -k, k)
    return dict(embedding=emb, w_ih=w_ih, w_hh=w_hh, b_ih=b_ih, b_hh=b_hh,
                w_lin=w_lin, b_lin=b_lin)


def xavier_uniform(key, shape):
    # torch.nn.init.xavier_uniform_ on a 2D (B, H) tensor:
    # fan_in = H (dim 1), fan_out = B (dim 0), a = sqrt(6 / (fan_in + fan_out)).
    fan_out, fan_in = shape
    a = math.sqrt(6.0 / (fan_in + fan_out))
    return jax.random.uniform(key, shape, jnp.float32, -a, a)


if __name__ == "__main__":
    # Small shapes consistent with the module.
    num_embeddings = 32     # V (vocab / output classes)
    embedding_dim = 16      # E
    hidden_size = 32        # H
    padding_idx = num_embeddings
    batch_size, seq_length = 8, 8

    root = jax.random.PRNGKey(0)
    k_par, k_seq, k_h, k_c = jax.random.split(root, 4)

    params = init_params(k_par, num_embeddings, embedding_dim,
                         hidden_size, padding_idx)
    sequence = jax.random.randint(k_seq, (batch_size, seq_length),
                                  0, num_embeddings, dtype=jnp.int32)
    # h_t / c_t default init inside forward() is xavier_uniform on zeros tensors.
    h0 = xavier_uniform(k_h, (batch_size, hidden_size))
    c0 = xavier_uniform(k_c, (batch_size, hidden_size))

    out = varnn_forward(sequence, params, h0, c0)
    out = jax.block_until_ready(out)
    assert out.shape == (batch_size, num_embeddings) and out.dtype == jnp.float32
    assert bool(jnp.all(jnp.isfinite(out)))
    print("KERNEL_OK")
</pallas_src>

<mosaic_0001>
module attributes {stable_mosaic.version = 11 : i64} {
  func.func @varnn_kernel(%arg0: memref<8x8x16xf32, #tpu.memory_space<vmem>>, %arg1: memref<32x16xf32, #tpu.memory_space<vmem>>, %arg2: memref<64x128xbf16, #tpu.memory_space<vmem>>, %arg3: memref<1x128xf32, #tpu.memory_space<vmem>>, %arg4: memref<32x32xbf16, #tpu.memory_space<vmem>>, %arg5: memref<1x32xf32, #tpu.memory_space<vmem>>, %arg6: memref<8x32xf32, #tpu.memory_space<vmem>>, %arg7: memref<8x32xf32, #tpu.memory_space<vmem>>, %arg8: memref<8x32xf32, #tpu.memory_space<vmem>>) attributes {dimension_semantics = [], scalar_prefetch = 0 : i64, scratch_operands = 0 : i64, tpu.core_type = #tpu.core_type<tc>} {
    %c0 = arith.constant 0 : index
    %c0_0 = arith.constant 0 : index
    %0 = vector.load %arg2[%c0, %c0_0] : memref<64x128xbf16, #tpu.memory_space<vmem>>, vector<64x128xbf16>
    %c0_1 = arith.constant 0 : index
    %c0_2 = arith.constant 0 : index
    %1 = vector.load %arg3[%c0_1, %c0_2] : memref<1x128xf32, #tpu.memory_space<vmem>>, vector<1x128xf32>
    %c0_3 = arith.constant 0 : index
    %c0_4 = arith.constant 0 : index
    %2 = vector.load %arg4[%c0_3, %c0_4] : memref<32x32xbf16, #tpu.memory_space<vmem>>, vector<32x32xbf16>
    %c0_5 = arith.constant 0 : index
    %c0_6 = arith.constant 0 : index
    %3 = vector.load %arg5[%c0_5, %c0_6] : memref<1x32xf32, #tpu.memory_space<vmem>>, vector<1x32xf32>
    %c0_7 = arith.constant 0 : index
    %c0_8 = arith.constant 0 : index
    %4 = vector.load %arg1[%c0_7, %c0_8] : memref<32x16xf32, #tpu.memory_space<vmem>>, vector<32x16xf32>
    %5 = tpu.iota {dimensions = array<i32: 1>} : vector<8x128xi32>
    %c64_i32 = arith.constant 64 : i32
    %6 = vector.broadcast %c64_i32 : i32 to vector<8x128xi32>
    %7 = arith.cmpi sge, %5, %6 : vector<8x128xi32>
    %c96_i32 = arith.constant 96 : i32
    %8 = vector.broadcast %c96_i32 : i32 to vector<8x128xi32>
    %9 = arith.cmpi slt, %5, %8 : vector<8x128xi32>
    %10 = arith.andi %7, %9 : vector<8x128xi1>
    %11 = tpu.iota {dimensions = array<i32: 1>} : vector<8x32xi32>
    %c0_9 = arith.constant 0 : index
    %c0_10 = arith.constant 0 : index
    %12 = vector.load %arg6[%c0_9, %c0_10] : memref<8x32xf32, #tpu.memory_space<vmem>>, vector<8x32xf32>
    %c0_11 = arith.constant 0 : index
    %c0_12 = arith.constant 0 : index
    %13 = vector.load %arg7[%c0_11, %c0_12] : memref<8x32xf32, #tpu.memory_space<vmem>>, vector<8x32xf32>
    %cst = arith.constant 0.000000e+00 : f32
    %14 = vector.broadcast %cst : f32 to vector<8x16xf32>
    %cst_13 = arith.constant 0.000000e+00 : f32
    %15 = vector.broadcast %cst_13 : f32 to vector<8x32xf32>
    %c0_i32 = arith.constant 0 : i32
    %16 = arith.index_cast %c0_i32 : i32 to index
    %c0_14 = arith.constant 0 : index
    %c0_15 = arith.constant 0 : index
    %17 = vector.load %arg0[%16, %c0_14, %c0_15] : memref<8x8x16xf32, #tpu.memory_space<vmem>>, vector<1x8x16xf32>
    %18 = vector.shape_cast %17 : vector<1x8x16xf32> to vector<8x16xf32>
    %19 = tpu.concatenate %14, %18, %12 in 1 : vector<8x16xf32>, vector<8x16xf32>, vector<8x32xf32> -> vector<8x64xf32>
    %20 = arith.truncf %19 : vector<8x64xf32> to vector<8x64xbf16>
    %cst_16 = arith.constant dense<0.000000e+00> : vector<8x128xf32>
    %21 = tpu.matmul %20, %0, %cst_16 {dimension_numbers = #tpu.dot_dimension_numbers<[1], [0], [0], [1], [0, 0, 1, 1], [], []>} : vector<8x64xbf16>, vector<64x128xbf16>, vector<8x128xf32> -> vector<8x128xf32>
    %22 = vector.broadcast %1 : vector<1x128xf32> to vector<8x128xf32>
    %23 = arith.addf %21, %22 : vector<8x128xf32>
    %24 = arith.negf %23 : vector<8x128xf32>
    %25 = math.exp %24 : vector<8x128xf32>
    %cst_17 = arith.constant 1.000000e+00 : f32
    %26 = vector.broadcast %cst_17 : f32 to vector<8x128xf32>
    %27 = arith.addf %26, %25 : vector<8x128xf32>
    %28 = arith.divf %26, %27 : vector<8x128xf32>
    %29 = math.tanh %23 : vector<8x128xf32>
    %30 = arith.select %10, %29, %28 : vector<8x128xi1>, vector<8x128xf32>
    %31 = vector.extract_strided_slice %30 {offsets = [0, 0], sizes = [8, 32], strides = [1, 1]} : vector<8x128xf32> to vector<8x32xf32>
    %32 = vector.extract_strided_slice %30 {offsets = [0, 32], sizes = [8, 32], strides = [1, 1]} : vector<8x128xf32> to vector<8x32xf32>
    %33 = vector.extract_strided_slice %30 {offsets = [0, 64], sizes = [8, 32], strides = [1, 1]} : vector<8x128xf32> to vector<8x32xf32>
    %34 = vector.extract_strided_slice %30 {offsets = [0, 96], sizes = [8, 32], strides = [1, 1]} : vector<8x128xf32> to vector<8x32xf32>
    %35 = arith.mulf %32, %13 : vector<8x32xf32>
    %36 = arith.mulf %31, %33 : vector<8x32xf32>
    %37 = arith.addf %35, %36 : vector<8x32xf32>
    %38 = math.tanh %37 : vector<8x32xf32>
    %39 = arith.mulf %34, %38 : vector<8x32xf32>
    %40 = arith.truncf %39 : vector<8x32xf32> to vector<8x32xbf16>
    %cst_18 = arith.constant dense<0.000000e+00> : vector<8x32xf32>
    %41 = tpu.matmul %40, %2, %cst_18 {dimension_numbers = #tpu.dot_dimension_numbers<[1], [0], [0], [1], [0, 0, 1, 1], [], []>} : vector<8x32xbf16>, vector<32x32xbf16>, vector<8x32xf32> -> vector<8x32xf32>
    %42 = vector.broadcast %3 : vector<1x32xf32> to vector<8x32xf32>
    %43 = arith.addf %41, %42 : vector<8x32xf32>
    %cst_19 = arith.constant dense<0xFF800000> : vector<8xf32>
    %44 = vector.multi_reduction <maximumf>, %43, %cst_19 [1] : vector<8x32xf32> to vector<8xf32>
    %45 = vector.shape_cast %44 : vector<8xf32> to vector<8x1xf32>
    %46 = vector.broadcast %45 : vector<8x1xf32> to vector<8x32xf32>
    %47 = arith.cmpf oeq, %43, %46 : vector<8x32xf32>
    %c32_i32 = arith.constant 32 : i32
    %48 = vector.broadcast %c32_i32 : i32 to vector<8x32xi32>
    %49 = arith.select %47, %11, %48 : vector<8x32xi1>, vector<8x32xi32>
    %cst_20 = arith.constant dense<2147483647> : vector<8xi32>
    %50 = vector.multi_reduction <minsi>, %49, %cst_20 [1] : vector<8x32xi32> to vector<8xi32>
    %51 = vector.shape_cast %50 : vector<8xi32> to vector<8x1xi32>
    %52 = vector.broadcast %51 : vector<8x1xi32> to vector<8x32xi32>
    %53 = arith.cmpi eq, %11, %52 : vector<8x32xi32>
    %54 = arith.extui %53 : vector<8x32xi1> to vector<8x32xi32>
    %55 = arith.sitofp %54 : vector<8x32xi32> to vector<8x32xf32>
    %cst_21 = arith.constant dense<0.000000e+00> : vector<8x16xf32>
    %56 = tpu.matmul %55, %4, %cst_21 {dimension_numbers = #tpu.dot_dimension_numbers<[1], [0], [0], [1], [0, 0, 1, 1], [], []>} : vector<8x32xf32>, vector<32x16xf32>, vector<8x16xf32> -> vector<8x16xf32>
    %c1_i32 = arith.constant 1 : i32
    %57 = arith.index_cast %c1_i32 : i32 to index
    %c0_22 = arith.constant 0 : index
    %c0_23 = arith.constant 0 : index
    %58 = vector.load %arg0[%57, %c0_22, %c0_23] : memref<8x8x16xf32, #tpu.memory_space<vmem>>, vector<1x8x16xf32>
    %59 = vector.shape_cast %58 : vector<1x8x16xf32> to vector<8x16xf32>
    %60 = tpu.concatenate %56, %59, %39 in 1 : vector<8x16xf32>, vector<8x16xf32>, vector<8x32xf32> -> vector<8x64xf32>
    %61 = arith.truncf %60 : vector<8x64xf32> to vector<8x64xbf16>
    %cst_24 = arith.constant dense<0.000000e+00> : vector<8x128xf32>
    %62 = tpu.matmul %61, %0, %cst_24 {dimension_numbers = #tpu.dot_dimension_numbers<[1], [0], [0], [1], [0, 0, 1, 1], [], []>} : vector<8x64xbf16>, vector<64x128xbf16>, vector<8x128xf32> -> vector<8x128xf32>
    %63 = vector.broadcast %1 : vector<1x128xf32> to vector<8x128xf32>
    %64 = arith.addf %62, %63 : vector<8x128xf32>
    %65 = arith.negf %64 : vector<8x128xf32>
    %66 = math.exp %65 : vector<8x128xf32>
    %cst_25 = arith.constant 1.000000e+00 : f32
    %67 = vector.broadcast %cst_25 : f32 to vector<8x128xf32>
    %68 = arith.addf %67, %66 : vector<8x128xf32>
    %69 = arith.divf %67, %68 : vector<8x128xf32>
    %70 = math.tanh %64 : vector<8x128xf32>
    %71 = arith.select %10, %70, %69 : vector<8x128xi1>, vector<8x128xf32>
    %72 = vector.extract_strided_slice %71 {offsets = [0, 0], sizes = [8, 32], strides = [1, 1]} : vector<8x128xf32> to vector<8x32xf32>
    %73 = vector.extract_strided_slice %71 {offsets = [0, 32], sizes = [8, 32], strides = [1, 1]} : vector<8x128xf32> to vector<8x32xf32>
    %74 = vector.extract_strided_slice %71 {offsets = [0, 64], sizes = [8, 32], strides = [1, 1]} : vector<8x128xf32> to vector<8x32xf32>
    %75 = vector.extract_strided_slice %71 {offsets = [0, 96], sizes = [8, 32], strides = [1, 1]} : vector<8x128xf32> to vector<8x32xf32>
    %76 = arith.mulf %73, %37 : vector<8x32xf32>
    %77 = arith.mulf %72, %74 : vector<8x32xf32>
    %78 = arith.addf %76, %77 : vector<8x32xf32>
    %79 = math.tanh %78 : vector<8x32xf32>
    %80 = arith.mulf %75, %79 : vector<8x32xf32>
    %81 = arith.truncf %80 : vector<8x32xf32> to vector<8x32xbf16>
    %cst_26 = arith.constant dense<0.000000e+00> : vector<8x32xf32>
    %82 = tpu.matmul %81, %2, %cst_26 {dimension_numbers = #tpu.dot_dimension_numbers<[1], [0], [0], [1], [0, 0, 1, 1], [], []>} : vector<8x32xbf16>, vector<32x32xbf16>, vector<8x32xf32> -> vector<8x32xf32>
    %83 = vector.broadcast %3 : vector<1x32xf32> to vector<8x32xf32>
    %84 = arith.addf %82, %83 : vector<8x32xf32>
    %cst_27 = arith.constant dense<0xFF800000> : vector<8xf32>
    %85 = vector.multi_reduction <maximumf>, %84, %cst_27 [1] : vector<8x32xf32> to vector<8xf32>
    %86 = vector.shape_cast %85 : vector<8xf32> to vector<8x1xf32>
    %87 = vector.broadcast %86 : vector<8x1xf32> to vector<8x32xf32>
    %88 = arith.cmpf oeq, %84, %87 : vector<8x32xf32>
    %c32_i32_28 = arith.constant 32 : i32
    %89 = vector.broadcast %c32_i32_28 : i32 to vector<8x32xi32>
    %90 = arith.select %88, %11, %89 : vector<8x32xi1>, vector<8x32xi32>
    %cst_29 = arith.constant dense<2147483647> : vector<8xi32>
    %91 = vector.multi_reduction <minsi>, %90, %cst_29 [1] : vector<8x32xi32> to vector<8xi32>
    %92 = vector.shape_cast %91 : vector<8xi32> to vector<8x1xi32>
    %93 = vector.broadcast %92 : vector<8x1xi32> to vector<8x32xi32>
    %94 = arith.cmpi eq, %11, %93 : vector<8x32xi32>
    %95 = arith.extui %94 : vector<8x32xi1> to vector<8x32xi32>
    %96 = arith.sitofp %95 : vector<8x32xi32> to vector<8x32xf32>
    %cst_30 = arith.constant dense<0.000000e+00> : vector<8x16xf32>
    %97 = tpu.matmul %96, %4, %cst_30 {dimension_numbers = #tpu.dot_dimension_numbers<[1], [0], [0], [1], [0, 0, 1, 1], [], []>} : vector<8x32xf32>, vector<32x16xf32>, vector<8x16xf32> -> vector<8x16xf32>
    %c2_i32 = arith.constant 2 : i32
    %98 = arith.index_cast %c2_i32 : i32 to index
    %c0_31 = arith.constant 0 : index
    %c0_32 = arith.constant 0 : index
    %99 = vector.load %arg0[%98, %c0_31, %c0_32] : memref<8x8x16xf32, #tpu.memory_space<vmem>>, vector<1x8x16xf32>
    %100 = vector.shape_cast %99 : vector<1x8x16xf32> to vector<8x16xf32>
    %101 = tpu.concatenate %97, %100, %80 in 1 : vector<8x16xf32>, vector<8x16xf32>, vector<8x32xf32> -> vector<8x64xf32>
    %102 = arith.truncf %101 : vector<8x64xf32> to vector<8x64xbf16>
    %cst_33 = arith.constant dense<0.000000e+00> : vector<8x128xf32>
    %103 = tpu.matmul %102, %0, %cst_33 {dimension_numbers = #tpu.dot_dimension_numbers<[1], [0], [0], [1], [0, 0, 1, 1], [], []>} : vector<8x64xbf16>, vector<64x128xbf16>, vector<8x128xf32> -> vector<8x128xf32>
    %104 = vector.broadcast %1 : vector<1x128xf32> to vector<8x128xf32>
    %105 = arith.addf %103, %104 : vector<8x128xf32>
    %106 = arith.negf %105 : vector<8x128xf32>
    %107 = math.exp %106 : vector<8x128xf32>
    %cst_34 = arith.constant 1.000000e+00 : f32
    %108 = vector.broadcast %cst_34 : f32 to vector<8x128xf32>
    %109 = arith.addf %108, %107 : vector<8x128xf32>
    %110 = arith.divf %108, %109 : vector<8x128xf32>
    %111 = math.tanh %105 : vector<8x128xf32>
    %112 = arith.select %10, %111, %110 : vector<8x128xi1>, vector<8x128xf32>
    %113 = vector.extract_strided_slice %112 {offsets = [0, 0], sizes = [8, 32], strides = [1, 1]} : vector<8x128xf32> to vector<8x32xf32>
    %114 = vector.extract_strided_slice %112 {offsets = [0, 32], sizes = [8, 32], strides = [1, 1]} : vector<8x128xf32> to vector<8x32xf32>
    %115 = vector.extract_strided_slice %112 {offsets = [0, 64], sizes = [8, 32], strides = [1, 1]} : vector<8x128xf32> to vector<8x32xf32>
    %116 = vector.extract_strided_slice %112 {offsets = [0, 96], sizes = [8, 32], strides = [1, 1]} : vector<8x128xf32> to vector<8x32xf32>
    %117 = arith.mulf %114, %78 : vector<8x32xf32>
    %118 = arith.mulf %113, %115 : vector<8x32xf32>
    %119 = arith.addf %117, %118 : vector<8x32xf32>
    %120 = math.tanh %119 : vector<8x32xf32>
    %121 = arith.mulf %116, %120 : vector<8x32xf32>
    %122 = arith.truncf %121 : vector<8x32xf32> to vector<8x32xbf16>
    %cst_35 = arith.constant dense<0.000000e+00> : vector<8x32xf32>
    %123 = tpu.matmul %122, %2, %cst_35 {dimension_numbers = #tpu.dot_dimension_numbers<[1], [0], [0], [1], [0, 0, 1, 1], [], []>} : vector<8x32xbf16>, vector<32x32xbf16>, vector<8x32xf32> -> vector<8x32xf32>
    %124 = vector.broadcast %3 : vector<1x32xf32> to vector<8x32xf32>
    %125 = arith.addf %123, %124 : vector<8x32xf32>
    %cst_36 = arith.constant dense<0xFF800000> : vector<8xf32>
    %126 = vector.multi_reduction <maximumf>, %125, %cst_36 [1] : vector<8x32xf32> to vector<8xf32>
    %127 = vector.shape_cast %126 : vector<8xf32> to vector<8x1xf32>
    %128 = vector.broadcast %127 : vector<8x1xf32> to vector<8x32xf32>
    %129 = arith.cmpf oeq, %125, %128 : vector<8x32xf32>
    %c32_i32_37 = arith.constant 32 : i32
    %130 = vector.broadcast %c32_i32_37 : i32 to vector<8x32xi32>
    %131 = arith.select %129, %11, %130 : vector<8x32xi1>, vector<8x32xi32>
    %cst_38 = arith.constant dense<2147483647> : vector<8xi32>
    %132 = vector.multi_reduction <minsi>, %131, %cst_38 [1] : vector<8x32xi32> to vector<8xi32>
    %133 = vector.shape_cast %132 : vector<8xi32> to vector<8x1xi32>
    %134 = vector.broadcast %133 : vector<8x1xi32> to vector<8x32xi32>
    %135 = arith.cmpi eq, %11, %134 : vector<8x32xi32>
    %136 = arith.extui %135 : vector<8x32xi1> to vector<8x32xi32>
    %137 = arith.sitofp %136 : vector<8x32xi32> to vector<8x32xf32>
    %cst_39 = arith.constant dense<0.000000e+00> : vector<8x16xf32>
    %138 = tpu.matmul %137, %4, %cst_39 {dimension_numbers = #tpu.dot_dimension_numbers<[1], [0], [0], [1], [0, 0, 1, 1], [], []>} : vector<8x32xf32>, vector<32x16xf32>, vector<8x16xf32> -> vector<8x16xf32>
    %c3_i32 = arith.constant 3 : i32
    %139 = arith.index_cast %c3_i32 : i32 to index
    %c0_40 = arith.constant 0 : index
    %c0_41 = arith.constant 0 : index
    %140 = vector.load %arg0[%139, %c0_40, %c0_41] : memref<8x8x16xf32, #tpu.memory_space<vmem>>, vector<1x8x16xf32>
    %141 = vector.shape_cast %140 : vector<1x8x16xf32> to vector<8x16xf32>
    %142 = tpu.concatenate %138, %141, %121 in 1 : vector<8x16xf32>, vector<8x16xf32>, vector<8x32xf32> -> vector<8x64xf32>
    %143 = arith.truncf %142 : vector<8x64xf32> to vector<8x64xbf16>
    %cst_42 = arith.constant dense<0.000000e+00> : vector<8x128xf32>
    %144 = tpu.matmul %143, %0, %cst_42 {dimension_numbers = #tpu.dot_dimension_numbers<[1], [0], [0], [1], [0, 0, 1, 1], [], []>} : vector<8x64xbf16>, vector<64x128xbf16>, vector<8x128xf32> -> vector<8x128xf32>
    %145 = vector.broadcast %1 : vector<1x128xf32> to vector<8x128xf32>
    %146 = arith.addf %144, %145 : vector<8x128xf32>
    %147 = arith.negf %146 : vector<8x128xf32>
    %148 = math.exp %147 : vector<8x128xf32>
    %cst_43 = arith.constant 1.000000e+00 : f32
    %149 = vector.broadcast %cst_43 : f32 to vector<8x128xf32>
    %150 = arith.addf %149, %148 : vector<8x128xf32>
    %151 = arith.divf %149, %150 : vector<8x128xf32>
    %152 = math.tanh %146 : vector<8x128xf32>
    %153 = arith.select %10, %152, %151 : vector<8x128xi1>, vector<8x128xf32>
    %154 = vector.extract_strided_slice %153 {offsets = [0, 0], sizes = [8, 32], strides = [1, 1]} : vector<8x128xf32> to vector<8x32xf32>
    %155 = vector.extract_strided_slice %153 {offsets = [0, 32], sizes = [8, 32], strides = [1, 1]} : vector<8x128xf32> to vector<8x32xf32>
    %156 = vector.extract_strided_slice %153 {offsets = [0, 64], sizes = [8, 32], strides = [1, 1]} : vector<8x128xf32> to vector<8x32xf32>
    %157 = vector.extract_strided_slice %153 {offsets = [0, 96], sizes = [8, 32], strides = [1, 1]} : vector<8x128xf32> to vector<8x32xf32>
    %158 = arith.mulf %155, %119 : vector<8x32xf32>
    %159 = arith.mulf %154, %156 : vector<8x32xf32>
    %160 = arith.addf %158, %159 : vector<8x32xf32>
    %161 = math.tanh %160 : vector<8x32xf32>
    %162 = arith.mulf %157, %161 : vector<8x32xf32>
    %163 = arith.truncf %162 : vector<8x32xf32> to vector<8x32xbf16>
    %cst_44 = arith.constant dense<0.000000e+00> : vector<8x32xf32>
    %164 = tpu.matmul %163, %2, %cst_44 {dimension_numbers = #tpu.dot_dimension_numbers<[1], [0], [0], [1], [0, 0, 1, 1], [], []>} : vector<8x32xbf16>, vector<32x32xbf16>, vector<8x32xf32> -> vector<8x32xf32>
    %165 = vector.broadcast %3 : vector<1x32xf32> to vector<8x32xf32>
    %166 = arith.addf %164, %165 : vector<8x32xf32>
    %cst_45 = arith.constant dense<0xFF800000> : vector<8xf32>
    %167 = vector.multi_reduction <maximumf>, %166, %cst_45 [1] : vector<8x32xf32> to vector<8xf32>
    %168 = vector.shape_cast %167 : vector<8xf32> to vector<8x1xf32>
    %169 = vector.broadcast %168 : vector<8x1xf32> to vector<8x32xf32>
    %170 = arith.cmpf oeq, %166, %169 : vector<8x32xf32>
    %c32_i32_46 = arith.constant 32 : i32
    %171 = vector.broadcast %c32_i32_46 : i32 to vector<8x32xi32>
    %172 = arith.select %170, %11, %171 : vector<8x32xi1>, vector<8x32xi32>
    %cst_47 = arith.constant dense<2147483647> : vector<8xi32>
    %173 = vector.multi_reduction <minsi>, %172, %cst_47 [1] : vector<8x32xi32> to vector<8xi32>
    %174 = vector.shape_cast %173 : vector<8xi32> to vector<8x1xi32>
    %175 = vector.broadcast %174 : vector<8x1xi32> to vector<8x32xi32>
    %176 = arith.cmpi eq, %11, %175 : vector<8x32xi32>
    %177 = arith.extui %176 : vector<8x32xi1> to vector<8x32xi32>
    %178 = arith.sitofp %177 : vector<8x32xi32> to vector<8x32xf32>
    %cst_48 = arith.constant dense<0.000000e+00> : vector<8x16xf32>
    %179 = tpu.matmul %178, %4, %cst_48 {dimension_numbers = #tpu.dot_dimension_numbers<[1], [0], [0], [1], [0, 0, 1, 1], [], []>} : vector<8x32xf32>, vector<32x16xf32>, vector<8x16xf32> -> vector<8x16xf32>
    %c4_i32 = arith.constant 4 : i32
    %180 = arith.index_cast %c4_i32 : i32 to index
    %c0_49 = arith.constant 0 : index
    %c0_50 = arith.constant 0 : index
    %181 = vector.load %arg0[%180, %c0_49, %c0_50] : memref<8x8x16xf32, #tpu.memory_space<vmem>>, vector<1x8x16xf32>
    %182 = vector.shape_cast %181 : vector<1x8x16xf32> to vector<8x16xf32>
    %183 = tpu.concatenate %179, %182, %162 in 1 : vector<8x16xf32>, vector<8x16xf32>, vector<8x32xf32> -> vector<8x64xf32>
    %184 = arith.truncf %183 : vector<8x64xf32> to vector<8x64xbf16>
    %cst_51 = arith.constant dense<0.000000e+00> : vector<8x128xf32>
    %185 = tpu.matmul %184, %0, %cst_51 {dimension_numbers = #tpu.dot_dimension_numbers<[1], [0], [0], [1], [0, 0, 1, 1], [], []>} : vector<8x64xbf16>, vector<64x128xbf16>, vector<8x128xf32> -> vector<8x128xf32>
    %186 = vector.broadcast %1 : vector<1x128xf32> to vector<8x128xf32>
    %187 = arith.addf %185, %186 : vector<8x128xf32>
    %188 = arith.negf %187 : vector<8x128xf32>
    %189 = math.exp %188 : vector<8x128xf32>
    %cst_52 = arith.constant 1.000000e+00 : f32
    %190 = vector.broadcast %cst_52 : f32 to vector<8x128xf32>
    %191 = arith.addf %190, %189 : vector<8x128xf32>
    %192 = arith.divf %190, %191 : vector<8x128xf32>
    %193 = math.tanh %187 : vector<8x128xf32>
    %194 = arith.select %10, %193, %192 : vector<8x128xi1>, vector<8x128xf32>
    %195 = vector.extract_strided_slice %194 {offsets = [0, 0], sizes = [8, 32], strides = [1, 1]} : vector<8x128xf32> to vector<8x32xf32>
    %196 = vector.extract_strided_slice %194 {offsets = [0, 32], sizes = [8, 32], strides = [1, 1]} : vector<8x128xf32> to vector<8x32xf32>
    %197 = vector.extract_strided_slice %194 {offsets = [0, 64], sizes = [8, 32], strides = [1, 1]} : vector<8x128xf32> to vector<8x32xf32>
    %198 = vector.extract_strided_slice %194 {offsets = [0, 96], sizes = [8, 32], strides = [1, 1]} : vector<8x128xf32> to vector<8x32xf32>
    %199 = arith.mulf %196, %160 : vector<8x32xf32>
    %200 = arith.mulf %195, %197 : vector<8x32xf32>
    %201 = arith.addf %199, %200 : vector<8x32xf32>
    %202 = math.tanh %201 : vector<8x32xf32>
    %203 = arith.mulf %198, %202 : vector<8x32xf32>
    %204 = arith.truncf %203 : vector<8x32xf32> to vector<8x32xbf16>
    %cst_53 = arith.constant dense<0.000000e+00> : vector<8x32xf32>
    %205 = tpu.matmul %204, %2, %cst_53 {dimension_numbers = #tpu.dot_dimension_numbers<[1], [0], [0], [1], [0, 0, 1, 1], [], []>} : vector<8x32xbf16>, vector<32x32xbf16>, vector<8x32xf32> -> vector<8x32xf32>
    %206 = vector.broadcast %3 : vector<1x32xf32> to vector<8x32xf32>
    %207 = arith.addf %205, %206 : vector<8x32xf32>
    %cst_54 = arith.constant dense<0xFF800000> : vector<8xf32>
    %208 = vector.multi_reduction <maximumf>, %207, %cst_54 [1] : vector<8x32xf32> to vector<8xf32>
    %209 = vector.shape_cast %208 : vector<8xf32> to vector<8x1xf32>
    %210 = vector.broadcast %209 : vector<8x1xf32> to vector<8x32xf32>
    %211 = arith.cmpf oeq, %207, %210 : vector<8x32xf32>
    %c32_i32_55 = arith.constant 32 : i32
    %212 = vector.broadcast %c32_i32_55 : i32 to vector<8x32xi32>
    %213 = arith.select %211, %11, %212 : vector<8x32xi1>, vector<8x32xi32>
    %cst_56 = arith.constant dense<2147483647> : vector<8xi32>
    %214 = vector.multi_reduction <minsi>, %213, %cst_56 [1] : vector<8x32xi32> to vector<8xi32>
    %215 = vector.shape_cast %214 : vector<8xi32> to vector<8x1xi32>
    %216 = vector.broadcast %215 : vector<8x1xi32> to vector<8x32xi32>
    %217 = arith.cmpi eq, %11, %216 : vector<8x32xi32>
    %218 = arith.extui %217 : vector<8x32xi1> to vector<8x32xi32>
    %219 = arith.sitofp %218 : vector<8x32xi32> to vector<8x32xf32>
    %cst_57 = arith.constant dense<0.000000e+00> : vector<8x16xf32>
    %220 = tpu.matmul %219, %4, %cst_57 {dimension_numbers = #tpu.dot_dimension_numbers<[1], [0], [0], [1], [0, 0, 1, 1], [], []>} : vector<8x32xf32>, vector<32x16xf32>, vector<8x16xf32> -> vector<8x16xf32>
    %c5_i32 = arith.constant 5 : i32
    %221 = arith.index_cast %c5_i32 : i32 to index
    %c0_58 = arith.constant 0 : index
    %c0_59 = arith.constant 0 : index
    %222 = vector.load %arg0[%221, %c0_58, %c0_59] : memref<8x8x16xf32, #tpu.memory_space<vmem>>, vector<1x8x16xf32>
    %223 = vector.shape_cast %222 : vector<1x8x16xf32> to vector<8x16xf32>
    %224 = tpu.concatenate %220, %223, %203 in 1 : vector<8x16xf32>, vector<8x16xf32>, vector<8x32xf32> -> vector<8x64xf32>
    %225 = arith.truncf %224 : vector<8x64xf32> to vector<8x64xbf16>
    %cst_60 = arith.constant dense<0.000000e+00> : vector<8x128xf32>
    %226 = tpu.matmul %225, %0, %cst_60 {dimension_numbers = #tpu.dot_dimension_numbers<[1], [0], [0], [1], [0, 0, 1, 1], [], []>} : vector<8x64xbf16>, vector<64x128xbf16>, vector<8x128xf32> -> vector<8x128xf32>
    %227 = vector.broadcast %1 : vector<1x128xf32> to vector<8x128xf32>
    %228 = arith.addf %226, %227 : vector<8x128xf32>
    %229 = arith.negf %228 : vector<8x128xf32>
    %230 = math.exp %229 : vector<8x128xf32>
    %cst_61 = arith.constant 1.000000e+00 : f32
    %231 = vector.broadcast %cst_61 : f32 to vector<8x128xf32>
    %232 = arith.addf %231, %230 : vector<8x128xf32>
    %233 = arith.divf %231, %232 : vector<8x128xf32>
    %234 = math.tanh %228 : vector<8x128xf32>
    %235 = arith.select %10, %234, %233 : vector<8x128xi1>, vector<8x128xf32>
    %236 = vector.extract_strided_slice %235 {offsets = [0, 0], sizes = [8, 32], strides = [1, 1]} : vector<8x128xf32> to vector<8x32xf32>
    %237 = vector.extract_strided_slice %235 {offsets = [0, 32], sizes = [8, 32], strides = [1, 1]} : vector<8x128xf32> to vector<8x32xf32>
    %238 = vector.extract_strided_slice %235 {offsets = [0, 64], sizes = [8, 32], strides = [1, 1]} : vector<8x128xf32> to vector<8x32xf32>
    %239 = vector.extract_strided_slice %235 {offsets = [0, 96], sizes = [8, 32], strides = [1, 1]} : vector<8x128xf32> to vector<8x32xf32>
    %240 = arith.mulf %237, %201 : vector<8x32xf32>
    %241 = arith.mulf %236, %238 : vector<8x32xf32>
    %242 = arith.addf %240, %241 : vector<8x32xf32>
    %243 = math.tanh %242 : vector<8x32xf32>
    %244 = arith.mulf %239, %243 : vector<8x32xf32>
    %245 = arith.truncf %244 : vector<8x32xf32> to vector<8x32xbf16>
    %cst_62 = arith.constant dense<0.000000e+00> : vector<8x32xf32>
    %246 = tpu.matmul %245, %2, %cst_62 {dimension_numbers = #tpu.dot_dimension_numbers<[1], [0], [0], [1], [0, 0, 1, 1], [], []>} : vector<8x32xbf16>, vector<32x32xbf16>, vector<8x32xf32> -> vector<8x32xf32>
    %247 = vector.broadcast %3 : vector<1x32xf32> to vector<8x32xf32>
    %248 = arith.addf %246, %247 : vector<8x32xf32>
    %cst_63 = arith.constant dense<0xFF800000> : vector<8xf32>
    %249 = vector.multi_reduction <maximumf>, %248, %cst_63 [1] : vector<8x32xf32> to vector<8xf32>
    %250 = vector.shape_cast %249 : vector<8xf32> to vector<8x1xf32>
    %251 = vector.broadcast %250 : vector<8x1xf32> to vector<8x32xf32>
    %252 = arith.cmpf oeq, %248, %251 : vector<8x32xf32>
    %c32_i32_64 = arith.constant 32 : i32
    %253 = vector.broadcast %c32_i32_64 : i32 to vector<8x32xi32>
    %254 = arith.select %252, %11, %253 : vector<8x32xi1>, vector<8x32xi32>
    %cst_65 = arith.constant dense<2147483647> : vector<8xi32>
    %255 = vector.multi_reduction <minsi>, %254, %cst_65 [1] : vector<8x32xi32> to vector<8xi32>
    %256 = vector.shape_cast %255 : vector<8xi32> to vector<8x1xi32>
    %257 = vector.broadcast %256 : vector<8x1xi32> to vector<8x32xi32>
    %258 = arith.cmpi eq, %11, %257 : vector<8x32xi32>
    %259 = arith.extui %258 : vector<8x32xi1> to vector<8x32xi32>
    %260 = arith.sitofp %259 : vector<8x32xi32> to vector<8x32xf32>
    %cst_66 = arith.constant dense<0.000000e+00> : vector<8x16xf32>
    %261 = tpu.matmul %260, %4, %cst_66 {dimension_numbers = #tpu.dot_dimension_numbers<[1], [0], [0], [1], [0, 0, 1, 1], [], []>} : vector<8x32xf32>, vector<32x16xf32>, vector<8x16xf32> -> vector<8x16xf32>
    %c6_i32 = arith.constant 6 : i32
    %262 = arith.index_cast %c6_i32 : i32 to index
    %c0_67 = arith.constant 0 : index
    %c0_68 = arith.constant 0 : index
    %263 = vector.load %arg0[%262, %c0_67, %c0_68] : memref<8x8x16xf32, #tpu.memory_space<vmem>>, vector<1x8x16xf32>
    %264 = vector.shape_cast %263 : vector<1x8x16xf32> to vector<8x16xf32>
    %265 = tpu.concatenate %261, %264, %244 in 1 : vector<8x16xf32>, vector<8x16xf32>, vector<8x32xf32> -> vector<8x64xf32>
    %266 = arith.truncf %265 : vector<8x64xf32> to vector<8x64xbf16>
    %cst_69 = arith.constant dense<0.000000e+00> : vector<8x128xf32>
    %267 = tpu.matmul %266, %0, %cst_69 {dimension_numbers = #tpu.dot_dimension_numbers<[1], [0], [0], [1], [0, 0, 1, 1], [], []>} : vector<8x64xbf16>, vector<64x128xbf16>, vector<8x128xf32> -> vector<8x128xf32>
    %268 = vector.broadcast %1 : vector<1x128xf32> to vector<8x128xf32>
    %269 = arith.addf %267, %268 : vector<8x128xf32>
    %270 = arith.negf %269 : vector<8x128xf32>
    %271 = math.exp %270 : vector<8x128xf32>
    %cst_70 = arith.constant 1.000000e+00 : f32
    %272 = vector.broadcast %cst_70 : f32 to vector<8x128xf32>
    %273 = arith.addf %272, %271 : vector<8x128xf32>
    %274 = arith.divf %272, %273 : vector<8x128xf32>
    %275 = math.tanh %269 : vector<8x128xf32>
    %276 = arith.select %10, %275, %274 : vector<8x128xi1>, vector<8x128xf32>
    %277 = vector.extract_strided_slice %276 {offsets = [0, 0], sizes = [8, 32], strides = [1, 1]} : vector<8x128xf32> to vector<8x32xf32>
    %278 = vector.extract_strided_slice %276 {offsets = [0, 32], sizes = [8, 32], strides = [1, 1]} : vector<8x128xf32> to vector<8x32xf32>
    %279 = vector.extract_strided_slice %276 {offsets = [0, 64], sizes = [8, 32], strides = [1, 1]} : vector<8x128xf32> to vector<8x32xf32>
    %280 = vector.extract_strided_slice %276 {offsets = [0, 96], sizes = [8, 32], strides = [1, 1]} : vector<8x128xf32> to vector<8x32xf32>
    %281 = arith.mulf %278, %242 : vector<8x32xf32>
    %282 = arith.mulf %277, %279 : vector<8x32xf32>
    %283 = arith.addf %281, %282 : vector<8x32xf32>
    %284 = math.tanh %283 : vector<8x32xf32>
    %285 = arith.mulf %280, %284 : vector<8x32xf32>
    %286 = arith.truncf %285 : vector<8x32xf32> to vector<8x32xbf16>
    %cst_71 = arith.constant dense<0.000000e+00> : vector<8x32xf32>
    %287 = tpu.matmul %286, %2, %cst_71 {dimension_numbers = #tpu.dot_dimension_numbers<[1], [0], [0], [1], [0, 0, 1, 1], [], []>} : vector<8x32xbf16>, vector<32x32xbf16>, vector<8x32xf32> -> vector<8x32xf32>
    %288 = vector.broadcast %3 : vector<1x32xf32> to vector<8x32xf32>
    %289 = arith.addf %287, %288 : vector<8x32xf32>
    %cst_72 = arith.constant dense<0xFF800000> : vector<8xf32>
    %290 = vector.multi_reduction <maximumf>, %289, %cst_72 [1] : vector<8x32xf32> to vector<8xf32>
    %291 = vector.shape_cast %290 : vector<8xf32> to vector<8x1xf32>
    %292 = vector.broadcast %291 : vector<8x1xf32> to vector<8x32xf32>
    %293 = arith.cmpf oeq, %289, %292 : vector<8x32xf32>
    %c32_i32_73 = arith.constant 32 : i32
    %294 = vector.broadcast %c32_i32_73 : i32 to vector<8x32xi32>
    %295 = arith.select %293, %11, %294 : vector<8x32xi1>, vector<8x32xi32>
    %cst_74 = arith.constant dense<2147483647> : vector<8xi32>
    %296 = vector.multi_reduction <minsi>, %295, %cst_74 [1] : vector<8x32xi32> to vector<8xi32>
    %297 = vector.shape_cast %296 : vector<8xi32> to vector<8x1xi32>
    %298 = vector.broadcast %297 : vector<8x1xi32> to vector<8x32xi32>
    %299 = arith.cmpi eq, %11, %298 : vector<8x32xi32>
    %300 = arith.extui %299 : vector<8x32xi1> to vector<8x32xi32>
    %301 = arith.sitofp %300 : vector<8x32xi32> to vector<8x32xf32>
    %cst_75 = arith.constant dense<0.000000e+00> : vector<8x16xf32>
    %302 = tpu.matmul %301, %4, %cst_75 {dimension_numbers = #tpu.dot_dimension_numbers<[1], [0], [0], [1], [0, 0, 1, 1], [], []>} : vector<8x32xf32>, vector<32x16xf32>, vector<8x16xf32> -> vector<8x16xf32>
    %c7_i32 = arith.constant 7 : i32
    %303 = arith.index_cast %c7_i32 : i32 to index
    %c0_76 = arith.constant 0 : index
    %c0_77 = arith.constant 0 : index
    %304 = vector.load %arg0[%303, %c0_76, %c0_77] : memref<8x8x16xf32, #tpu.memory_space<vmem>>, vector<1x8x16xf32>
    %305 = vector.shape_cast %304 : vector<1x8x16xf32> to vector<8x16xf32>
    %306 = tpu.concatenate %302, %305, %285 in 1 : vector<8x16xf32>, vector<8x16xf32>, vector<8x32xf32> -> vector<8x64xf32>
    %307 = arith.truncf %306 : vector<8x64xf32> to vector<8x64xbf16>
    %cst_78 = arith.constant dense<0.000000e+00> : vector<8x128xf32>
    %308 = tpu.matmul %307, %0, %cst_78 {dimension_numbers = #tpu.dot_dimension_numbers<[1], [0], [0], [1], [0, 0, 1, 1], [], []>} : vector<8x64xbf16>, vector<64x128xbf16>, vector<8x128xf32> -> vector<8x128xf32>
    %309 = vector.broadcast %1 : vector<1x128xf32> to vector<8x128xf32>
    %310 = arith.addf %308, %309 : vector<8x128xf32>
    %311 = arith.negf %310 : vector<8x128xf32>
    %312 = math.exp %311 : vector<8x128xf32>
    %cst_79 = arith.constant 1.000000e+00 : f32
    %313 = vector.broadcast %cst_79 : f32 to vector<8x128xf32>
    %314 = arith.addf %313, %312 : vector<8x128xf32>
    %315 = arith.divf %313, %314 : vector<8x128xf32>
    %316 = math.tanh %310 : vector<8x128xf32>
    %317 = arith.select %10, %316, %315 : vector<8x128xi1>, vector<8x128xf32>
    %318 = vector.extract_strided_slice %317 {offsets = [0, 0], sizes = [8, 32], strides = [1, 1]} : vector<8x128xf32> to vector<8x32xf32>
    %319 = vector.extract_strided_slice %317 {offsets = [0, 32], sizes = [8, 32], strides = [1, 1]} : vector<8x128xf32> to vector<8x32xf32>
    %320 = vector.extract_strided_slice %317 {offsets = [0, 64], sizes = [8, 32], strides = [1, 1]} : vector<8x128xf32> to vector<8x32xf32>
    %321 = vector.extract_strided_slice %317 {offsets = [0, 96], sizes = [8, 32], strides = [1, 1]} : vector<8x128xf32> to vector<8x32xf32>
    %322 = arith.mulf %319, %283 : vector<8x32xf32>
    %323 = arith.mulf %318, %320 : vector<8x32xf32>
    %324 = arith.addf %322, %323 : vector<8x32xf32>
    %325 = math.tanh %324 : vector<8x32xf32>
    %326 = arith.mulf %321, %325 : vector<8x32xf32>
    %327 = arith.truncf %326 : vector<8x32xf32> to vector<8x32xbf16>
    %cst_80 = arith.constant dense<0.000000e+00> : vector<8x32xf32>
    %328 = tpu.matmul %327, %2, %cst_80 {dimension_numbers = #tpu.dot_dimension_numbers<[1], [0], [0], [1], [0, 0, 1, 1], [], []>} : vector<8x32xbf16>, vector<32x32xbf16>, vector<8x32xf32> -> vector<8x32xf32>
    %329 = vector.broadcast %3 : vector<1x32xf32> to vector<8x32xf32>
    %330 = arith.addf %328, %329 : vector<8x32xf32>
    %cst_81 = arith.constant dense<0xFF800000> : vector<8xf32>
    %331 = vector.multi_reduction <maximumf>, %330, %cst_81 [1] : vector<8x32xf32> to vector<8xf32>
    %332 = vector.shape_cast %331 : vector<8xf32> to vector<8x1xf32>
    %333 = vector.broadcast %332 : vector<8x1xf32> to vector<8x32xf32>
    %334 = arith.cmpf oeq, %330, %333 : vector<8x32xf32>
    %c32_i32_82 = arith.constant 32 : i32
    %335 = vector.broadcast %c32_i32_82 : i32 to vector<8x32xi32>
    %336 = arith.select %334, %11, %335 : vector<8x32xi1>, vector<8x32xi32>
    %cst_83 = arith.constant dense<2147483647> : vector<8xi32>
    %337 = vector.multi_reduction <minsi>, %336, %cst_83 [1] : vector<8x32xi32> to vector<8xi32>
    %338 = vector.shape_cast %337 : vector<8xi32> to vector<8x1xi32>
    %339 = vector.broadcast %338 : vector<8x1xi32> to vector<8x32xi32>
    %340 = arith.cmpi eq, %11, %339 : vector<8x32xi32>
    %341 = arith.extui %340 : vector<8x32xi1> to vector<8x32xi32>
    %342 = arith.sitofp %341 : vector<8x32xi32> to vector<8x32xf32>
    %cst_84 = arith.constant dense<0.000000e+00> : vector<8x16xf32>
    %343 = tpu.matmul %342, %4, %cst_84 {dimension_numbers = #tpu.dot_dimension_numbers<[1], [0], [0], [1], [0, 0, 1, 1], [], []>} : vector<8x32xf32>, vector<32x16xf32>, vector<8x16xf32> -> vector<8x16xf32>
    %c8_i32 = arith.constant 8 : i32
    %c0_85 = arith.constant 0 : index
    %c0_86 = arith.constant 0 : index
    %344 = vector.load %arg8[%c0_85, %c0_86] : memref<8x32xf32, #tpu.memory_space<vmem>>, vector<8x32xf32>
    tpu.vector_store %arg8[%c0_85, %c0_86], %330 {strides = array<i32>} : memref<8x32xf32, #tpu.memory_space<vmem>>, vector<8x32xf32>,
    return
  }
}

</mosaic_0001>

<llo_original>
// kernel: tpu_custom_call.1
$region0: #{tpu_custom_call.1}
  #allocation0 [shape = 'u32[]', space=smem, size = 0x4, offset = 0x4, fixed_abs, tag = 'smem constant byte address 0x4 - core index']
  #allocation1 [shape = 'u32[144,128]{1,0:T(1,128)}', space=vmem, size = 0x12000, scoped, tag = 'internal scratch']
  %s0 = inlined_call_operand.hbm [shape: f32[8,8,16], index: 0, kind: input, shape index: {}]
  %s1 = inlined_call_operand.vmem [shape: f32[32,16], index: 1, kind: input, shape index: {}]
  %s2 = inlined_call_operand.vmem [shape: bf16[64,128], index: 2, kind: input, shape index: {}]
  %s3 = inlined_call_operand.vmem [shape: f32[1,128], index: 3, kind: input, shape index: {}]
  %s4 = inlined_call_operand.vmem [shape: bf16[32,32], index: 4, kind: input, shape index: {}]
  %s5 = inlined_call_operand.vmem [shape: f32[1,32], index: 5, kind: input, shape index: {}]
  %s6 = inlined_call_operand.vmem [shape: f32[8,32], index: 6, kind: input, shape index: {}]
  %s7 = inlined_call_operand.vmem [shape: f32[8,32], index: 7, kind: input, shape index: {}]
  %s8 = inlined_call_operand.hbm [shape: f32[8,32], index: 8, kind: output, shape index: {}]
  %s9 = sld [smem:[#allocation0]]
  $region46: #{tpu_custom_call.1} parent=0
    _
  %s11 = ssub.s32 1, %s9
  %s12 = scalar_select 0, %s11, %s9
  $region1: #{tpu_custom_call.1} parent=0
    #allocation2 [shape = 'u8[32768]{0}', space=vmem, size = 0x8000, scoped, tag = 'input window, operand 0, single buffered']
    #allocation3 [shape = 's32[1]{0}', space=sflag, size = 0x4, scoped, tag = 'scoped memory for tpu_custom_call.1']
    #allocation4 [shape = 's32[1]{0}', space=sflag, size = 0x4, scoped, tag = 'scoped memory for tpu_custom_call.1']
    #allocation5 [shape = 'u8[4096]{0}', space=vmem, size = 0x1000, scoped, tag = 'output window, operand 0, single buffered']
    %13 = vsyncpa [#allocation3], 0
    %14 = vsyncpa [#allocation4], 0
    // Predicated region
    $region2: #{tpu_custom_call.1} parent=1 // pred_check
      _
    $region3: #{tpu_custom_call.1} parent=1 // pred_check_branch
      %16 = sbr.rel (0) target = $region5
    $region4: #{tpu_custom_call.1} parent=1 // pred_region
      %s18 = ssub.s32 1024, 1024
      %19 = vsyncadd [#allocation3], %s18
      %s20 = sshll.u32 [#allocation2], 4
      %s21 = int_to_ptr.vmem [resolvable:$true] %s20
      %26 = dma.hbm_to_vmem [thread:$0]  %s0, 1024, %s21, [#allocation3], 128, 128, 8
    $region5: #{tpu_custom_call.1} parent=1 // pred_fallthru
      _
    // Predicated region
    $region6: #{tpu_custom_call.1} parent=1 // pred_check
      _
    $region7: #{tpu_custom_call.1} parent=1 // pred_check_branch
      %28 = sbr.rel (0) target = $region9
    $region8: #{tpu_custom_call.1} parent=1 // pred_region
      _
    $region9: #{tpu_custom_call.1} parent=1 // pred_fallthru
      _
    // Predicated region
    $region10: #{tpu_custom_call.1} parent=1 // pred_check
      _
    $region11: #{tpu_custom_call.1} parent=1 // pred_check_branch
      %30 = sbr.rel (0) target = $region13
    $region12: #{tpu_custom_call.1} parent=1 // pred_region
      _
    $region13: #{tpu_custom_call.1} parent=1 // pred_fallthru
      _
    // Predicated region
    $region14: #{tpu_custom_call.1} parent=1 // pred_check
      _
    $region15: #{tpu_custom_call.1} parent=1 // pred_check_branch
      %32 = sbr.rel (0) target = $region17
    $region16: #{tpu_custom_call.1} parent=1 // pred_region
      _
    $region17: #{tpu_custom_call.1} parent=1 // pred_fallthru
      _
    // Predicated region
    $region18: #{tpu_custom_call.1} parent=1 // pred_check
      _
    $region19: #{tpu_custom_call.1} parent=1 // pred_check_branch
      %34 = sbr.rel (0) target = $region21
    $region20: #{tpu_custom_call.1} parent=1 // pred_region
      _
    $region21: #{tpu_custom_call.1} parent=1 // pred_fallthru
      _
    // Predicated region
    $region22: #{tpu_custom_call.1} parent=1 // pred_check
      _
    $region23: #{tpu_custom_call.1} parent=1 // pred_check_branch
      %36 = sbr.rel (0) target = $region25
    $region24: #{tpu_custom_call.1} parent=1 // pred_region
      _
    $region25: #{tpu_custom_call.1} parent=1 // pred_fallthru
      _
    // Predicated region
    $region26: #{tpu_custom_call.1} parent=1 // pred_check
      _
    $region27: #{tpu_custom_call.1} parent=1 // pred_check_branch
      %38 = sbr.rel (0) target = $region29
    $region28: #{tpu_custom_call.1} parent=1 // pred_region
      _
    $region29: #{tpu_custom_call.1} parent=1 // pred_fallthru
      _
    // Predicated region
    $region30: #{tpu_custom_call.1} parent=1 // pred_check
      _
    $region31: #{tpu_custom_call.1} parent=1 // pred_check_branch
      %40 = sbr.rel (0) target = $region33
    $region32: #{tpu_custom_call.1} parent=1 // pred_region
      _
    $region33: #{tpu_custom_call.1} parent=1 // pred_fallthru
      _
    // Predicated region
    $region34: #{tpu_custom_call.1} parent=1 // pred_check
      _
    $region35: #{tpu_custom_call.1} parent=1 // pred_check_branch
      %42 = sbr.rel (0) target = $region37
    $region36: #{tpu_custom_call.1} parent=1 // pred_region
      %43 = dma.done [#allocation3], 1024
    $region37: #{tpu_custom_call.1} parent=1 // pred_fallthru
      _
    %v45 = vld [vmem:[%s2] sm:$0xf]
    %v46 = vld [vmem:[%s2 + $0x4] sm:$0xf]
    %v47 = vld [vmem:[%s2 + $0x8] sm:$0xf]
    %v48 = vld [vmem:[%s2 + $0xc] sm:$0xf]
    %v49 = vld [vmem:[%s2 + $0x10] sm:$0xf]
    %v50 = vld [vmem:[%s2 + $0x14] sm:$0xf]
    %v51 = vld [vmem:[%s2 + $0x18] sm:$0xf]
    %v52 = vld [vmem:[%s2 + $0x1c] sm:$0xf]
    %v53 = vld [vmem:[%s3] sm:$0x1]
    %v54 = vld [vmem:[%s4] sm:$0xf]
    %v55 = vld [vmem:[%s4 + $0x4] sm:$0xf]
    %v56 = vld [vmem:[%s4 + $0x8] sm:$0xf]
    %v57 = vld [vmem:[%s4 + $0xc] sm:$0xf]
    %v58 = vld [vmem:[%s5] sm:$0x1]
    %v59 = vld [vmem:[%s1] sm:$0xff]
    %v60 = vld [vmem:[%s1 + $0x8] sm:$0xff]
    %v61 = vld [vmem:[%s1 + $0x10] sm:$0xff]
    %v62 = vld [vmem:[%s1 + $0x18] sm:$0xff]
    %v63 = vlaneseq
    %v64 = vand.u32 %v63, 127
    %vm65 = vcmp.ge.s32.totalorder %v64, 64
    %vm66 = vcmp.lt.s32.totalorder %v64, 96
    %vm67 = vmand %vm65, %vm66
    %v68 = vld [vmem:[%s6] sm:$0xff]
    %v69 = vld [vmem:[%s7] sm:$0xff]
    %v70 = vld [vmem:[#allocation2] sm:$0xff]
    %72 = vrot.lane.b32.xlu0 %v70, 16
    %v73 = vpop.permute.xlu0 %72
    %76 = vrot.lane.b32.xlu0 %v68, 32
    %v77 = vpop.permute.xlu0 %76
    %vm79 = vcmask 130048
    %v80 = vsel %vm79, 0.0, %v73
    %vm81 = vcmask 261120
    %v82 = vsel %vm81, %v80, %v77
    %v83 = vpack.c.bf16 %v82, %v82
    %v85 = vlaneseq
    %v86 = vshrl.u32 %v85, 7
    %v87 = vsub.s32 0, %v86
    %v88 = vrot.slane %v53, %v87
    %v98 = vunpack.c.l.b16 %v45
    %v99 = vunpack.c.l.b16 %v46
    %v100 = vunpack.c.l.b16 %v47
    %v101 = vunpack.c.l.b16 %v48
    %v102 = vunpack.c.l.b16 %v49
    %v103 = vunpack.c.l.b16 %v50
    %v104 = vunpack.c.l.b16 %v51
    %v105 = vunpack.c.l.b16 %v52
    %v106 = vpack.c.b16 %v99, %v98
    %v107 = vpack.c.b16 %v101, %v100
    %v108 = vpack.c.b16 %v103, %v102
    %v109 = vpack.c.b16 %v105, %v104
    %vm114 = vcmask 523264
    %v116 = vsel %vm114, %v83, 0
    %118 = vmatprep.subr.bf16.mxu0 0
    %119 = vmatpush1.bf16.msra.mxu0 %v106
    %120 = vmatprep.subr.bf16.mxu0 0
    %121 = vmatpush1.bf16.msra.mxu0 %v107
    %122 = vmatprep.subr.bf16.mxu0 0
    %123 = vmatpush1.bf16.msra.mxu0 %v108
    %124 = vmatprep.subr.bf16.mxu0 0
    %125 = vmatpush1.bf16.msra.mxu0 %v109
    %126 = vmatprep.subr.bf16.mxu0 0
    %127 = vmatpush1.bf16.msra.mxu0 0
    %128 = vmatprep.subr.bf16.mxu0 0
    %129 = vmatpush1.bf16.msra.mxu0 0
    %130 = vmatprep.subr.bf16.mxu0 0
    %131 = vmatpush1.bf16.msra.mxu0 0
    %132 = vmatprep.subr.bf16.mxu0 0
    %133 = vmatpush1.bf16.msra.mxu0 0
    %134 = vmatprep.subr.bf16.mxu0 0
    %135 = vmatpush1.bf16.msra.mxu0 0
    %136 = vmatprep.subr.bf16.mxu0 0
    %137 = vmatpush1.bf16.msra.mxu0 0
    %138 = vmatprep.subr.bf16.mxu0 0
    %139 = vmatpush1.bf16.msra.mxu0 0
    %140 = vmatprep.subr.bf16.mxu0 0
    %141 = vmatpush1.bf16.msra.mxu0 0
    %142 = vmatprep.subr.bf16.mxu0 0
    %143 = vmatpush1.bf16.msra.mxu0 0
    %144 = vmatprep.subr.bf16.mxu0 0
    %145 = vmatpush1.bf16.msra.mxu0 0
    %146 = vmatprep.subr.bf16.mxu0 0
    %147 = vmatpush1.bf16.msra.mxu0 0
    %148 = vmatprep.subr.bf16.mxu0 0
    %149 = vmatpush1.bf16.msra.mxu0 0
    %150 = vmatprep.mubr.bf16.mxu0 0
    %151 = vmatmul.mubr.bf16.gmra.mrb[0].mxu0 %v116
    %v152 = vpop.f32.mrb[0].mxu0
    %v153 = vadd.f32 %v88, %v152
    %v154 = vpop.f32.mrb[0].mxu0
    %v155 = vpop.f32.mrb[0].mxu0
    %v156 = vpop.f32.mrb[0].mxu0
    %157 = vdwg.mxu0
    %v158 = vxor.u32 %v153, 2147483648
    %v159 = vmul.f32 %v158, 1.442695
    %v160 = vpow.pop %v159
    %v161 = vadd.f32 %v160, 1.0
    %v162 = vrcp.pop %v161
    %v163 = vmul.f32 1.0, %v162
    %v164 = vtanh.pop %v153
    %v165 = vsel %vm67, %v164, %v163
    %167 = vrot.lane.b32.xlu0 %v69, 32
    %v168 = vpop.permute.xlu0 %167
    %v170 = vmul.f32 %v165, %v168
    %172 = vrot.lane.b32.xlu0 %v165, 64
    %v173 = vpop.permute.xlu0 %172
    %v175 = vmul.f32 %v165, %v173
    %177 = vrot.lane.b32.xlu0 %v175, 32
    %v178 = vpop.permute.xlu0 %177
    %v180 = vadd.f32 %v170, %v178
    %v181 = vtanh.pop %v180
    %183 = vrot.lane.b32.xlu0 %v181, 64
    %v184 = vpop.permute.xlu0 %183
    %v186 = vmul.f32 %v165, %v184
    %v187 = vpack.c.bf16 %v186, %v186
    %v189 = vlaneseq
    %v190 = vshrl.u32 %v189, 7
    %v191 = vsub.s32 0, %v190
    %v192 = vrot.slane %v58, %v191
    %195 = vrot.lane.b32.xlu0 %v187, 32
    %v196 = vpop.permute.xlu0 %195
    %v201 = vunpack.c.l.b16 %v54
    %v202 = vunpack.c.l.b16 %v55
    %v203 = vunpack.c.l.b16 %v56
    %v204 = vunpack.c.l.b16 %v57
    %v205 = vpack.c.b16 %v202, %v201
    %v206 = vpack.c.b16 %v204, %v203
    %v210 = vsel %vm81, %v196, 0
    %212 = vmatprep.subr.bf16.mxu0 0
    %213 = vmatpush1.bf16.msra.mxu0 %v205
    %214 = vmatprep.subr.bf16.mxu0 0
    %215 = vmatpush1.bf16.msra.mxu0 %v206
    %216 = vmatprep.subr.bf16.mxu0 0
    %217 = vmatpush1.bf16.msra.mxu0 0
    %218 = vmatprep.subr.bf16.mxu0 0
    %219 = vmatpush1.bf16.msra.mxu0 0
    %220 = vmatprep.subr.bf16.mxu0 0
    %221 = vmatpush1.bf16.msra.mxu0 0
    %222 = vmatprep.subr.bf16.mxu0 0
    %223 = vmatpush1.bf16.msra.mxu0 0
    %224 = vmatprep.subr.bf16.mxu0 0
    %225 = vmatpush1.bf16.msra.mxu0 0
    %226 = vmatprep.subr.bf16.mxu0 0
    %227 = vmatpush1.bf16.msra.mxu0 0
    %228 = vmatprep.subr.bf16.mxu0 0
    %229 = vmatpush1.bf16.msra.mxu0 0
    %230 = vmatprep.subr.bf16.mxu0 0
    %231 = vmatpush1.bf16.msra.mxu0 0
    %232 = vmatprep.subr.bf16.mxu0 0
    %233 = vmatpush1.bf16.msra.mxu0 0
    %234 = vmatprep.subr.bf16.mxu0 0
    %235 = vmatpush1.bf16.msra.mxu0 0
    %236 = vmatprep.subr.bf16.mxu0 0
    %237 = vmatpush1.bf16.msra.mxu0 0
    %238 = vmatprep.subr.bf16.mxu0 0
    %239 = vmatpush1.bf16.msra.mxu0 0
    %240 = vmatprep.subr.bf16.mxu0 0
    %241 = vmatpush1.bf16.msra.mxu0 0
    %242 = vmatprep.subr.bf16.mxu0 0
    %243 = vmatpush1.bf16.msra.mxu0 0
    %244 = vmatprep.mubr.bf16.mxu0 0
    %245 = vmatmul.mubr.bf16.gmra.mrb[0].mxu0 %v210
    %v246 = vpop.f32.mrb[0].mxu0
    %v247 = vadd.f32 %v192, %v246
    %v248 = vpop.f32.mrb[0].mxu0
    %v249 = vpop.f32.mrb[0].mxu0
    %v250 = vpop.f32.mrb[0].mxu0
    %251 = vdwg.mxu0
    %v252 = vsel %vm81, %v247, -inf
    %253 = vmax.xlane.f32.xlu0 %v252
    %v254 = vpop.xlane.xlu0 %253
    %vm255 = vcmp.eq.f32.partialorder %v247, %v254
    %v256 = vsel %vm255, %v64, 32
    %v257 = vsel %vm81, %v256, 2147483647
    %v258 = vand.u32 %v257, 65535
    %v259 = vshra.s32 %v257, 16
    %v260 = vcvt.s32.f32 %v258
    %v261 = vcvt.s32.f32 %v259
    %262 = vmin.xlane.f32.xlu0 %v261
    %v263 = vpop.xlane.xlu0 %262
    %vm264 = vcmp.eq.f32.partialorder %v261, %v263
    %v265 = vsel %vm264, %v260, inf
    %266 = vmin.xlane.f32.xlu0 %v265
    %v267 = vpop.xlane.xlu0 %266
    %v268 = vcvt.f32.s32 %v267
    %v269 = vcvt.f32.s32 %v263
    %v270 = vshll.u32 %v269, 16
    %v271 = vadd.s32 %v270, %v268
    %vm272 = vcmp.eq.s32.totalorder %v64, %v271
    %v273 = vsel %vm272, 1, 0
    %v274 = vcvt.s32.f32 %v273
    %v276 = vsel %vm81, %v274, 0
    %278 = vmatprep.subr.mxu0 0.0
    %279 = vmatpush1.msra.mxu0 %v59
    %280 = vmatprep.subr.mxu0 0.0
    %281 = vmatpush1.msra.mxu0 %v60
    %282 = vmatprep.subr.mxu0 0.0
    %283 = vmatpush1.msra.mxu0 %v61
    %284 = vmatprep.subr.mxu0 0.0
    %285 = vmatpush1.msra.mxu0 %v62
    %286 = vmatprep.subr.mxu0 0.0
    %287 = vmatpush1.msra.mxu0 0.0
    %288 = vmatprep.subr.mxu0 0.0
    %289 = vmatpush1.msra.mxu0 0.0
    %290 = vmatprep.subr.mxu0 0.0
    %291 = vmatpush1.msra.mxu0 0.0
    %292 = vmatprep.subr.mxu0 0.0
    %293 = vmatpush1.msra.mxu0 0.0
    %294 = vmatprep.subr.mxu0 0.0
    %295 = vmatpush1.msra.mxu0 0.0
    %296 = vmatprep.subr.mxu0 0.0
    %297 = vmatpush1.msra.mxu0 0.0
    %298 = vmatprep.subr.mxu0 0.0
    %299 = vmatpush1.msra.mxu0 0.0
    %300 = vmatprep.subr.mxu0 0.0
    %301 = vmatpush1.msra.mxu0 0.0
    %302 = vmatprep.subr.mxu0 0.0
    %303 = vmatpush1.msra.mxu0 0.0
    %304 = vmatprep.subr.mxu0 0.0
    %305 = vmatpush1.msra.mxu0 0.0
    %306 = vmatprep.subr.mxu0 0.0
    %307 = vmatpush1.msra.mxu0 0.0
    %308 = vmatprep.subr.mxu0 0.0
    %309 = vmatpush1.msra.mxu0 0.0
    %310 = vmatprep.subr.mxu0 0.0
    %311 = vmatpush1.msra.mxu0 0.0
    %312 = vmatprep.subr.mxu0 0.0
    %313 = vmatpush1.msra.mxu0 0.0
    %314 = vmatprep.subr.mxu0 0.0
    %315 = vmatpush1.msra.mxu0 0.0
    %316 = vmatprep.subr.mxu0 0.0
    %317 = vmatpush1.msra.mxu0 0.0
    %318 = vmatprep.subr.mxu0 0.0
    %319 = vmatpush1.msra.mxu0 0.0
    %320 = vmatprep.subr.mxu0 0.0
    %321 = vmatpush1.msra.mxu0 0.0
    %322 = vmatprep.subr.mxu0 0.0
    %323 = vmatpush1.msra.mxu0 0.0
    %324 = vmatprep.subr.mxu0 0.0
    %325 = vmatpush1.msra.mxu0 0.0
    %326 = vmatprep.subr.mxu0 0.0
    %327 = vmatpush1.msra.mxu0 0.0
    %328 = vmatprep.subr.mxu0 0.0
    %329 = vmatpush1.msra.mxu0 0.0
    %330 = vmatprep.subr.mxu0 0.0
    %331 = vmatpush1.msra.mxu0 0.0
    %332 = vmatprep.subr.mxu0 0.0
    %333 = vmatpush1.msra.mxu0 0.0
    %334 = vmatprep.subr.mxu0 0.0
    %335 = vmatpush1.msra.mxu0 0.0
    %336 = vmatprep.subr.mxu0 0.0
    %337 = vmatpush1.msra.mxu0 0.0
    %338 = vmatprep.subr.mxu0 0.0
    %339 = vmatpush1.msra.mxu0 0.0
    %340 = vmatprep.subr.mxu0 0.0
    %341 = vmatpush1.msra.mxu0 0.0
    %342 = vmatprep.mubr.f32.mxu0 0.0
    %343 = vmatmul.mubr.f32.gmra.mrb[0].mxu0 %v276
    %v344 = vpop.f32.mrb[0].mxu0
    %v345 = vadd.f32 0.0, %v344
    %v346 = vpop.f32.mrb[0].mxu0
    %347 = vdwg.mxu0
    %s348 = scalar_lea.vmem [#allocation2], 8
    %v349 = vld [vmem:[%s348] sm:$0xff]
    %351 = vrot.lane.b32.xlu0 %v349, 16
    %v352 = vpop.permute.xlu0 %351
    %355 = vrot.lane.b32.xlu0 %v186, 64
    %v356 = vpop.permute.xlu0 %355
    %v358 = vsel %vm79, %v345, %v352
    %v359 = vsel %vm81, %v358, %v356
    %v360 = vpack.c.bf16 %v359, %v359
    %v362 = vsel %vm114, %v360, 0
    %364 = vmatprep.subr.bf16.mxu0 0
    %365 = vmatpush1.bf16.msra.mxu0 %v106
    %366 = vmatprep.subr.bf16.mxu0 0
    %367 = vmatpush1.bf16.msra.mxu0 %v107
    %368 = vmatprep.subr.bf16.mxu0 0
    %369 = vmatpush1.bf16.msra.mxu0 %v108
    %370 = vmatprep.subr.bf16.mxu0 0
    %371 = vmatpush1.bf16.msra.mxu0 %v109
    %372 = vmatprep.subr.bf16.mxu0 0
    %373 = vmatpush1.bf16.msra.mxu0 0
    %374 = vmatprep.subr.bf16.mxu0 0
    %375 = vmatpush1.bf16.msra.mxu0 0
    %376 = vmatprep.subr.bf16.mxu0 0
    %377 = vmatpush1.bf16.msra.mxu0 0
    %378 = vmatprep.subr.bf16.mxu0 0
    %379 = vmatpush1.bf16.msra.mxu0 0
    %380 = vmatprep.subr.bf16.mxu0 0
    %381 = vmatpush1.bf16.msra.mxu0 0
    %382 = vmatprep.subr.bf16.mxu0 0
    %383 = vmatpush1.bf16.msra.mxu0 0
    %384 = vmatprep.subr.bf16.mxu0 0
    %385 = vmatpush1.bf16.msra.mxu0 0
    %386 = vmatprep.subr.bf16.mxu0 0
    %387 = vmatpush1.bf16.msra.mxu0 0
    %388 = vmatprep.subr.bf16.mxu0 0
    %389 = vmatpush1.bf16.msra.mxu0 0
    %390 = vmatprep.subr.bf16.mxu0 0
    %391 = vmatpush1.bf16.msra.mxu0 0
    %392 = vmatprep.subr.bf16.mxu0 0
    %393 = vmatpush1.bf16.msra.mxu0 0
    %394 = vmatprep.subr.bf16.mxu0 0
    %395 = vmatpush1.bf16.msra.mxu0 0
    %396 = vmatprep.mubr.bf16.mxu0 0
    %397 = vmatmul.mubr.bf16.gmra.mrb[0].mxu0 %v362
    %v398 = vpop.f32.mrb[0].mxu0
    %v399 = vadd.f32 %v88, %v398
    %v400 = vpop.f32.mrb[0].mxu0
    %v401 = vpop.f32.mrb[0].mxu0
    %v402 = vpop.f32.mrb[0].mxu0
    %403 = vdwg.mxu0
    %v404 = vxor.u32 %v399, 2147483648
    %v405 = vmul.f32 %v404, 1.442695
    %v406 = vpow.pop %v405
    %v407 = vadd.f32 %v406, 1.0
    %v408 = vrcp.pop %v407
    %v409 = vmul.f32 1.0, %v408
    %v410 = vtanh.pop %v399
    %v411 = vsel %vm67, %v410, %v409
    %v412 = vmul.f32 %v411, %v180
    %414 = vrot.lane.b32.xlu0 %v411, 64
    %v415 = vpop.permute.xlu0 %414
    %v417 = vmul.f32 %v411, %v415
    %419 = vrot.lane.b32.xlu0 %v417, 32
    %v420 = vpop.permute.xlu0 %419
    %v422 = vadd.f32 %v412, %v420
    %v423 = vtanh.pop %v422
    %425 = vrot.lane.b32.xlu0 %v423, 64
    %v426 = vpop.permute.xlu0 %425
    %v428 = vmul.f32 %v411, %v426
    %v429 = vpack.c.bf16 %v428, %v428
    %431 = vrot.lane.b32.xlu0 %v429, 32
    %v432 = vpop.permute.xlu0 %431
    %v434 = vsel %vm81, %v432, 0
    %436 = vmatprep.subr.bf16.mxu0 0
    %437 = vmatpush1.bf16.msra.mxu0 %v205
    %438 = vmatprep.subr.bf16.mxu0 0
    %439 = vmatpush1.bf16.msra.mxu0 %v206
    %440 = vmatprep.subr.bf16.mxu0 0
    %441 = vmatpush1.bf16.msra.mxu0 0
    %442 = vmatprep.subr.bf16.mxu0 0
    %443 = vmatpush1.bf16.msra.mxu0 0
    %444 = vmatprep.subr.bf16.mxu0 0
    %445 = vmatpush1.bf16.msra.mxu0 0
    %446 = vmatprep.subr.bf16.mxu0 0
    %447 = vmatpush1.bf16.msra.mxu0 0
    %448 = vmatprep.subr.bf16.mxu0 0
    %449 = vmatpush1.bf16.msra.mxu0 0
    %450 = vmatprep.subr.bf16.mxu0 0
    %451 = vmatpush1.bf16.msra.mxu0 0
    %452 = vmatprep.subr.bf16.mxu0 0
    %453 = vmatpush1.bf16.msra.mxu0 0
    %454 = vmatprep.subr.bf16.mxu0 0
    %455 = vmatpush1.bf16.msra.mxu0 0
    %456 = vmatprep.subr.bf16.mxu0 0
    %457 = vmatpush1.bf16.msra.mxu0 0
    %458 = vmatprep.subr.bf16.mxu0 0
    %459 = vmatpush1.bf16.msra.mxu0 0
    %460 = vmatprep.subr.bf16.mxu0 0
    %461 = vmatpush1.bf16.msra.mxu0 0
    %462 = vmatprep.subr.bf16.mxu0 0
    %463 = vmatpush1.bf16.msra.mxu0 0
    %464 = vmatprep.subr.bf16.mxu0 0
    %465 = vmatpush1.bf16.msra.mxu0 0
    %466 = vmatprep.subr.bf16.mxu0 0
    %467 = vmatpush1.bf16.msra.mxu0 0
    %468 = vmatprep.mubr.bf16.mxu0 0
    %469 = vmatmul.mubr.bf16.gmra.mrb[0].mxu0 %v434
    %v470 = vpop.f32.mrb[0].mxu0
    %v471 = vadd.f32 %v192, %v470
    %v472 = vpop.f32.mrb[0].mxu0
    %v473 = vpop.f32.mrb[0].mxu0
    %v474 = vpop.f32.mrb[0].mxu0
    %475 = vdwg.mxu0
    %v476 = vsel %vm81, %v471, -inf
    %477 = vmax.xlane.f32.xlu0 %v476
    %v478 = vpop.xlane.xlu0 %477
    %vm479 = vcmp.eq.f32.partialorder %v471, %v478
    %v480 = vsel %vm479, %v64, 32
    %v481 = vsel %vm81, %v480, 2147483647
    %v482 = vand.u32 %v481, 65535
    %v483 = vshra.s32 %v481, 16
    %v484 = vcvt.s32.f32 %v482
    %v485 = vcvt.s32.f32 %v483
    %486 = vmin.xlane.f32.xlu0 %v485
    %v487 = vpop.xlane.xlu0 %486
    %vm488 = vcmp.eq.f32.partialorder %v485, %v487
    %v489 = vsel %vm488, %v484, inf
    %490 = vmin.xlane.f32.xlu0 %v489
    %v491 = vpop.xlane.xlu0 %490
    %v492 = vcvt.f32.s32 %v491
    %v493 = vcvt.f32.s32 %v487
    %v494 = vshll.u32 %v493, 16
    %v495 = vadd.s32 %v494, %v492
    %vm496 = vcmp.eq.s32.totalorder %v64, %v495
    %v497 = vsel %vm496, 1, 0
    %v498 = vcvt.s32.f32 %v497
    %v500 = vsel %vm81, %v498, 0
    %502 = vmatprep.subr.mxu0 0.0
    %503 = vmatpush1.msra.mxu0 %v59
    %504 = vmatprep.subr.mxu0 0.0
    %505 = vmatpush1.msra.mxu0 %v60
    %506 = vmatprep.subr.mxu0 0.0
    %507 = vmatpush1.msra.mxu0 %v61
    %508 = vmatprep.subr.mxu0 0.0
    %509 = vmatpush1.msra.mxu0 %v62
    %510 = vmatprep.subr.mxu0 0.0
    %511 = vmatpush1.msra.mxu0 0.0
    %512 = vmatprep.subr.mxu0 0.0
    %513 = vmatpush1.msra.mxu0 0.0
    %514 = vmatprep.subr.mxu0 0.0
    %515 = vmatpush1.msra.mxu0 0.0
    %516 = vmatprep.subr.mxu0 0.0
    %517 = vmatpush1.msra.mxu0 0.0
    %518 = vmatprep.subr.mxu0 0.0
    %519 = vmatpush1.msra.mxu0 0.0
    %520 = vmatprep.subr.mxu0 0.0
    %521 = vmatpush1.msra.mxu0 0.0
    %522 = vmatprep.subr.mxu0 0.0
    %523 = vmatpush1.msra.mxu0 0.0
    %524 = vmatprep.subr.mxu0 0.0
    %525 = vmatpush1.msra.mxu0 0.0
    %526 = vmatprep.subr.mxu0 0.0
    %527 = vmatpush1.msra.mxu0 0.0
    %528 = vmatprep.subr.mxu0 0.0
    %529 = vmatpush1.msra.mxu0 0.0
    %530 = vmatprep.subr.mxu0 0.0
    %531 = vmatpush1.msra.mxu0 0.0
    %532 = vmatprep.subr.mxu0 0.0
    %533 = vmatpush1.msra.mxu0 0.0
    %534 = vmatprep.subr.mxu0 0.0
    %535 = vmatpush1.msra.mxu0 0.0
    %536 = vmatprep.subr.mxu0 0.0
    %537 = vmatpush1.msra.mxu0 0.0
    %538 = vmatprep.subr.mxu0 0.0
    %539 = vmatpush1.msra.mxu0 0.0
    %540 = vmatprep.subr.mxu0 0.0
    %541 = vmatpush1.msra.mxu0 0.0
    %542 = vmatprep.subr.mxu0 0.0
    %543 = vmatpush1.msra.mxu0 0.0
    %544 = vmatprep.subr.mxu0 0.0
    %545 = vmatpush1.msra.mxu0 0.0
    %546 = vmatprep.subr.mxu0 0.0
    %547 = vmatpush1.msra.mxu0 0.0
    %548 = vmatprep.subr.mxu0 0.0
    %549 = vmatpush1.msra.mxu0 0.0
    %550 = vmatprep.subr.mxu0 0.0
    %551 = vmatpush1.msra.mxu0 0.0
    %552 = vmatprep.subr.mxu0 0.0
    %553 = vmatpush1.msra.mxu0 0.0
    %554 = vmatprep.subr.mxu0 0.0
    %555 = vmatpush1.msra.mxu0 0.0
    %556 = vmatprep.subr.mxu0 0.0
    %557 = vmatpush1.msra.mxu0 0.0
    %558 = vmatprep.subr.mxu0 0.0
    %559 = vmatpush1.msra.mxu0 0.0
    %560 = vmatprep.subr.mxu0 0.0
    %561 = vmatpush1.msra.mxu0 0.0
    %562 = vmatprep.subr.mxu0 0.0
    %563 = vmatpush1.msra.mxu0 0.0
    %564 = vmatprep.subr.mxu0 0.0
    %565 = vmatpush1.msra.mxu0 0.0
    %566 = vmatprep.mubr.f32.mxu0 0.0
    %567 = vmatmul.mubr.f32.gmra.mrb[0].mxu0 %v500
    %v568 = vpop.f32.mrb[0].mxu0
    %v569 = vadd.f32 0.0, %v568
    %v570 = vpop.f32.mrb[0].mxu0
    %571 = vdwg.mxu0
    %s572 = scalar_lea.vmem [#allocation2], 16
    %v573 = vld [vmem:[%s572] sm:$0xff]
    %575 = vrot.lane.b32.xlu0 %v573, 16
    %v576 = vpop.permute.xlu0 %575
    %579 = vrot.lane.b32.xlu0 %v428, 64
    %v580 = vpop.permute.xlu0 %579
    %v582 = vsel %vm79, %v569, %v576
    %v583 = vsel %vm81, %v582, %v580
    %v584 = vpack.c.bf16 %v583, %v583
    %v586 = vsel %vm114, %v584, 0
    %588 = vmatprep.subr.bf16.mxu0 0
    %589 = vmatpush1.bf16.msra.mxu0 %v106
    %590 = vmatprep.subr.bf16.mxu0 0
    %591 = vmatpush1.bf16.msra.mxu0 %v107
    %592 = vmatprep.subr.bf16.mxu0 0
    %593 = vmatpush1.bf16.msra.mxu0 %v108
    %594 = vmatprep.subr.bf16.mxu0 0
    %595 = vmatpush1.bf16.msra.mxu0 %v109
    %596 = vmatprep.subr.bf16.mxu0 0
    %597 = vmatpush1.bf16.msra.mxu0 0
    %598 = vmatprep.subr.bf16.mxu0 0
    %599 = vmatpush1.bf16.msra.mxu0 0
    %600 = vmatprep.subr.bf16.mxu0 0
    %601 = vmatpush1.bf16.msra.mxu0 0
    %602 = vmatprep.subr.bf16.mxu0 0
    %603 = vmatpush1.bf16.msra.mxu0 0
    %604 = vmatprep.subr.bf16.mxu0 0
    %605 = vmatpush1.bf16.msra.mxu0 0
    %606 = vmatprep.subr.bf16.mxu0 0
    %607 = vmatpush1.bf16.msra.mxu0 0
    %608 = vmatprep.subr.bf16.mxu0 0
    %609 = vmatpush1.bf16.msra.mxu0 0
    %610 = vmatprep.subr.bf16.mxu0 0
    %611 = vmatpush1.bf16.msra.mxu0 0
    %612 = vmatprep.subr.bf16.mxu0 0
    %613 = vmatpush1.bf16.msra.mxu0 0
    %614 = vmatprep.subr.bf16.mxu0 0
    %615 = vmatpush1.bf16.msra.mxu0 0
    %616 = vmatprep.subr.bf16.mxu0 0
    %617 = vmatpush1.bf16.msra.mxu0 0
    %618 = vmatprep.subr.bf16.mxu0 0
    %619 = vmatpush1.bf16.msra.mxu0 0
    %620 = vmatprep.mubr.bf16.mxu0 0
    %621 = vmatmul.mubr.bf16.gmra.mrb[0].mxu0 %v586
    %v622 = vpop.f32.mrb[0].mxu0
    %v623 = vadd.f32 %v88, %v622
    %v624 = vpop.f32.mrb[0].mxu0
    %v625 = vpop.f32.mrb[0].mxu0
    %v626 = vpop.f32.mrb[0].mxu0
    %627 = vdwg.mxu0
    %v628 = vxor.u32 %v623, 2147483648
    %v629 = vmul.f32 %v628, 1.442695
    %v630 = vpow.pop %v629
    %v631 = vadd.f32 %v630, 1.0
    %v632 = vrcp.pop %v631
    %v633 = vmul.f32 1.0, %v632
    %v634 = vtanh.pop %v623
    %v635 = vsel %vm67, %v634, %v633
    %v636 = vmul.f32 %v635, %v422
    %638 = vrot.lane.b32.xlu0 %v635, 64
    %v639 = vpop.permute.xlu0 %638
    %v641 = vmul.f32 %v635, %v639
    %643 = vrot.lane.b32.xlu0 %v641, 32
    %v644 = vpop.permute.xlu0 %643
    %v646 = vadd.f32 %v636, %v644
    %v647 = vtanh.pop %v646
    %649 = vrot.lane.b32.xlu0 %v647, 64
    %v650 = vpop.permute.xlu0 %649
    %v652 = vmul.f32 %v635, %v650
    %v653 = vpack.c.bf16 %v652, %v652
    %655 = vrot.lane.b32.xlu0 %v653, 32
    %v656 = vpop.permute.xlu0 %655
    %v658 = vsel %vm81, %v656, 0
    %660 = vmatprep.subr.bf16.mxu0 0
    %661 = vmatpush1.bf16.msra.mxu0 %v205
    %662 = vmatprep.subr.bf16.mxu0 0
    %663 = vmatpush1.bf16.msra.mxu0 %v206
    %664 = vmatprep.subr.bf16.mxu0 0
    %665 = vmatpush1.bf16.msra.mxu0 0
    %666 = vmatprep.subr.bf16.mxu0 0
    %667 = vmatpush1.bf16.msra.mxu0 0
    %668 = vmatprep.subr.bf16.mxu0 0
    %669 = vmatpush1.bf16.msra.mxu0 0
    %670 = vmatprep.subr.bf16.mxu0 0
    %671 = vmatpush1.bf16.msra.mxu0 0
    %672 = vmatprep.subr.bf16.mxu0 0
    %673 = vmatpush1.bf16.msra.mxu0 0
    %674 = vmatprep.subr.bf16.mxu0 0
    %675 = vmatpush1.bf16.msra.mxu0 0
    %676 = vmatprep.subr.bf16.mxu0 0
    %677 = vmatpush1.bf16.msra.mxu0 0
    %678 = vmatprep.subr.bf16.mxu0 0
    %679 = vmatpush1.bf16.msra.mxu0 0
    %680 = vmatprep.subr.bf16.mxu0 0
    %681 = vmatpush1.bf16.msra.mxu0 0
    %682 = vmatprep.subr.bf16.mxu0 0
    %683 = vmatpush1.bf16.msra.mxu0 0
    %684 = vmatprep.subr.bf16.mxu0 0
    %685 = vmatpush1.bf16.msra.mxu0 0
    %686 = vmatprep.subr.bf16.mxu0 0
    %687 = vmatpush1.bf16.msra.mxu0 0
    %688 = vmatprep.subr.bf16.mxu0 0
    %689 = vmatpush1.bf16.msra.mxu0 0
    %690 = vmatprep.subr.bf16.mxu0 0
    %691 = vmatpush1.bf16.msra.mxu0 0
    %692 = vmatprep.mubr.bf16.mxu0 0
    %693 = vmatmul.mubr.bf16.gmra.mrb[0].mxu0 %v658
    %v694 = vpop.f32.mrb[0].mxu0
    %v695 = vadd.f32 %v192, %v694
    %v696 = vpop.f32.mrb[0].mxu0
    %v697 = vpop.f32.mrb[0].mxu0
    %v698 = vpop.f32.mrb[0].mxu0
    %699 = vdwg.mxu0
    %v700 = vsel %vm81, %v695, -inf
    %701 = vmax.xlane.f32.xlu0 %v700
    %v702 = vpop.xlane.xlu0 %701
    %vm703 = vcmp.eq.f32.partialorder %v695, %v702
    %v704 = vsel %vm703, %v64, 32
    %v705 = vsel %vm81, %v704, 2147483647
    %v706 = vand.u32 %v705, 65535
    %v707 = vshra.s32 %v705, 16
    %v708 = vcvt.s32.f32 %v706
    %v709 = vcvt.s32.f32 %v707
    %710 = vmin.xlane.f32.xlu0 %v709
    %v711 = vpop.xlane.xlu0 %710
    %vm712 = vcmp.eq.f32.partialorder %v709, %v711
    %v713 = vsel %vm712, %v708, inf
    %714 = vmin.xlane.f32.xlu0 %v713
    %v715 = vpop.xlane.xlu0 %714
    %v716 = vcvt.f32.s32 %v715
    %v717 = vcvt.f32.s32 %v711
    %v718 = vshll.u32 %v717, 16
    %v719 = vadd.s32 %v718, %v716
    %vm720 = vcmp.eq.s32.totalorder %v64, %v719
    %v721 = vsel %vm720, 1, 0
    %v722 = vcvt.s32.f32 %v721
    %v724 = vsel %vm81, %v722, 0
    %726 = vmatprep.subr.mxu0 0.0
    %727 = vmatpush1.msra.mxu0 %v59
    %728 = vmatprep.subr.mxu0 0.0
    %729 = vmatpush1.msra.mxu0 %v60
    %730 = vmatprep.subr.mxu0 0.0
    %731 = vmatpush1.msra.mxu0 %v61
    %732 = vmatprep.subr.mxu0 0.0
    %733 = vmatpush1.msra.mxu0 %v62
    %734 = vmatprep.subr.mxu0 0.0
    %735 = vmatpush1.msra.mxu0 0.0
    %736 = vmatprep.subr.mxu0 0.0
    %737 = vmatpush1.msra.mxu0 0.0
    %738 = vmatprep.subr.mxu0 0.0
    %739 = vmatpush1.msra.mxu0 0.0
    %740 = vmatprep.subr.mxu0 0.0
    %741 = vmatpush1.msra.mxu0 0.0
    %742 = vmatprep.subr.mxu0 0.0
    %743 = vmatpush1.msra.mxu0 0.0
    %744 = vmatprep.subr.mxu0 0.0
    %745 = vmatpush1.msra.mxu0 0.0
    %746 = vmatprep.subr.mxu0 0.0
    %747 = vmatpush1.msra.mxu0 0.0
    %748 = vmatprep.subr.mxu0 0.0
    %749 = vmatpush1.msra.mxu0 0.0
    %750 = vmatprep.subr.mxu0 0.0
    %751 = vmatpush1.msra.mxu0 0.0
    %752 = vmatprep.subr.mxu0 0.0
    %753 = vmatpush1.msra.mxu0 0.0
    %754 = vmatprep.subr.mxu0 0.0
    %755 = vmatpush1.msra.mxu0 0.0
    %756 = vmatprep.subr.mxu0 0.0
    %757 = vmatpush1.msra.mxu0 0.0
    %758 = vmatprep.subr.mxu0 0.0
    %759 = vmatpush1.msra.mxu0 0.0
    %760 = vmatprep.subr.mxu0 0.0
    %761 = vmatpush1.msra.mxu0 0.0
    %762 = vmatprep.subr.mxu0 0.0
    %763 = vmatpush1.msra.mxu0 0.0
    %764 = vmatprep.subr.mxu0 0.0
    %765 = vmatpush1.msra.mxu0 0.0
    %766 = vmatprep.subr.mxu0 0.0
    %767 = vmatpush1.msra.mxu0 0.0
    %768 = vmatprep.subr.mxu0 0.0
    %769 = vmatpush1.msra.mxu0 0.0
    %770 = vmatprep.subr.mxu0 0.0
    %771 = vmatpush1.msra.mxu0 0.0
    %772 = vmatprep.subr.mxu0 0.0
    %773 = vmatpush1.msra.mxu0 0.0
    %774 = vmatprep.subr.mxu0 0.0
    %775 = vmatpush1.msra.mxu0 0.0
    %776 = vmatprep.subr.mxu0 0.0
    %777 = vmatpush1.msra.mxu0 0.0
    %778 = vmatprep.subr.mxu0 0.0
    %779 = vmatpush1.msra.mxu0 0.0
    %780 = vmatprep.subr.mxu0 0.0
    %781 = vmatpush1.msra.mxu0 0.0
    %782 = vmatprep.subr.mxu0 0.0
    %783 = vmatpush1.msra.mxu0 0.0
    %784 = vmatprep.subr.mxu0 0.0
    %785 = vmatpush1.msra.mxu0 0.0
    %786 = vmatprep.subr.mxu0 0.0
    %787 = vmatpush1.msra.mxu0 0.0
    %788 = vmatprep.subr.mxu0 0.0
    %789 = vmatpush1.msra.mxu0 0.0
    %790 = vmatprep.mubr.f32.mxu0 0.0
    %791 = vmatmul.mubr.f32.gmra.mrb[0].mxu0 %v724
    %v792 = vpop.f32.mrb[0].mxu0
    %v793 = vadd.f32 0.0, %v792
    %v794 = vpop.f32.mrb[0].mxu0
    %795 = vdwg.mxu0
    %s796 = scalar_lea.vmem [#allocation2], 24
    %v797 = vld [vmem:[%s796] sm:$0xff]
    %799 = vrot.lane.b32.xlu0 %v797, 16
    %v800 = vpop.permute.xlu0 %799
    %803 = vrot.lane.b32.xlu0 %v652, 64
    %v804 = vpop.permute.xlu0 %803
    %v806 = vsel %vm79, %v793, %v800
    %v807 = vsel %vm81, %v806, %v804
    %v808 = vpack.c.bf16 %v807, %v807
    %v810 = vsel %vm114, %v808, 0
    %812 = vmatprep.subr.bf16.mxu0 0
    %813 = vmatpush1.bf16.msra.mxu0 %v106
    %814 = vmatprep.subr.bf16.mxu0 0
    %815 = vmatpush1.bf16.msra.mxu0 %v107
    %816 = vmatprep.subr.bf16.mxu0 0
    %817 = vmatpush1.bf16.msra.mxu0 %v108
    %818 = vmatprep.subr.bf16.mxu0 0
    %819 = vmatpush1.bf16.msra.mxu0 %v109
    %820 = vmatprep.subr.bf16.mxu0 0
    %821 = vmatpush1.bf16.msra.mxu0 0
    %822 = vmatprep.subr.bf16.mxu0 0
    %823 = vmatpush1.bf16.msra.mxu0 0
    %824 = vmatprep.subr.bf16.mxu0 0
    %825 = vmatpush1.bf16.msra.mxu0 0
    %826 = vmatprep.subr.bf16.mxu0 0
    %827 = vmatpush1.bf16.msra.mxu0 0
    %828 = vmatprep.subr.bf16.mxu0 0
    %829 = vmatpush1.bf16.msra.mxu0 0
    %830 = vmatprep.subr.bf16.mxu0 0
    %831 = vmatpush1.bf16.msra.mxu0 0
    %832 = vmatprep.subr.bf16.mxu0 0
    %833 = vmatpush1.bf16.msra.mxu0 0
    %834 = vmatprep.subr.bf16.mxu0 0
    %835 = vmatpush1.bf16.msra.mxu0 0
    %836 = vmatprep.subr.bf16.mxu0 0
    %837 = vmatpush1.bf16.msra.mxu0 0
    %838 = vmatprep.subr.bf16.mxu0 0
    %839 = vmatpush1.bf16.msra.mxu0 0
    %840 = vmatprep.subr.bf16.mxu0 0
    %841 = vmatpush1.bf16.msra.mxu0 0
    %842 = vmatprep.subr.bf16.mxu0 0
    %843 = vmatpush1.bf16.msra.mxu0 0
    %844 = vmatprep.mubr.bf16.mxu0 0
    %845 = vmatmul.mubr.bf16.gmra.mrb[0].mxu0 %v810
    %v846 = vpop.f32.mrb[0].mxu0
    %v847 = vadd.f32 %v88, %v846
    %v848 = vpop.f32.mrb[0].mxu0
    %v849 = vpop.f32.mrb[0].mxu0
    %v850 = vpop.f32.mrb[0].mxu0
    %851 = vdwg.mxu0
    %v852 = vxor.u32 %v847, 2147483648
    %v853 = vmul.f32 %v852, 1.442695
    %v854 = vpow.pop %v853
    %v855 = vadd.f32 %v854, 1.0
    %v856 = vrcp.pop %v855
    %v857 = vmul.f32 1.0, %v856
    %v858 = vtanh.pop %v847
    %v859 = vsel %vm67, %v858, %v857
    %v860 = vmul.f32 %v859, %v646
    %862 = vrot.lane.b32.xlu0 %v859, 64
    %v863 = vpop.permute.xlu0 %862
    %v865 = vmul.f32 %v859, %v863
    %867 = vrot.lane.b32.xlu0 %v865, 32
    %v868 = vpop.permute.xlu0 %867
    %v870 = vadd.f32 %v860, %v868
    %v871 = vtanh.pop %v870
    %873 = vrot.lane.b32.xlu0 %v871, 64
    %v874 = vpop.permute.xlu0 %873
    %v876 = vmul.f32 %v859, %v874
    %v877 = vpack.c.bf16 %v876, %v876
    %879 = vrot.lane.b32.xlu0 %v877, 32
    %v880 = vpop.permute.xlu0 %879
    %v882 = vsel %vm81, %v880, 0
    %884 = vmatprep.subr.bf16.mxu0 0
    %885 = vmatpush1.bf16.msra.mxu0 %v205
    %886 = vmatprep.subr.bf16.mxu0 0
    %887 = vmatpush1.bf16.msra.mxu0 %v206
    %888 = vmatprep.subr.bf16.mxu0 0
    %889 = vmatpush1.bf16.msra.mxu0 0
    %890 = vmatprep.subr.bf16.mxu0 0
    %891 = vmatpush1.bf16.msra.mxu0 0
    %892 = vmatprep.subr.bf16.mxu0 0
    %893 = vmatpush1.bf16.msra.mxu0 0
    %894 = vmatprep.subr.bf16.mxu0 0
    %895 = vmatpush1.bf16.msra.mxu0 0
    %896 = vmatprep.subr.bf16.mxu0 0
    %897 = vmatpush1.bf16.msra.mxu0 0
    %898 = vmatprep.subr.bf16.mxu0 0
    %899 = vmatpush1.bf16.msra.mxu0 0
    %900 = vmatprep.subr.bf16.mxu0 0
    %901 = vmatpush1.bf16.msra.mxu0 0
    %902 = vmatprep.subr.bf16.mxu0 0
    %903 = vmatpush1.bf16.msra.mxu0 0
    %904 = vmatprep.subr.bf16.mxu0 0
    %905 = vmatpush1.bf16.msra.mxu0 0
    %906 = vmatprep.subr.bf16.mxu0 0
    %907 = vmatpush1.bf16.msra.mxu0 0
    %908 = vmatprep.subr.bf16.mxu0 0
    %909 = vmatpush1.bf16.msra.mxu0 0
    %910 = vmatprep.subr.bf16.mxu0 0
    %911 = vmatpush1.bf16.msra.mxu0 0
    %912 = vmatprep.subr.bf16.mxu0 0
    %913 = vmatpush1.bf16.msra.mxu0 0
    %914 = vmatprep.subr.bf16.mxu0 0
    %915 = vmatpush1.bf16.msra.mxu0 0
    %916 = vmatprep.mubr.bf16.mxu0 0
    %917 = vmatmul.mubr.bf16.gmra.mrb[0].mxu0 %v882
    %v918 = vpop.f32.mrb[0].mxu0
    %v919 = vadd.f32 %v192, %v918
    %v920 = vpop.f32.mrb[0].mxu0
    %v921 = vpop.f32.mrb[0].mxu0
    %v922 = vpop.f32.mrb[0].mxu0
    %923 = vdwg.mxu0
    %v924 = vsel %vm81, %v919, -inf
    %925 = vmax.xlane.f32.xlu0 %v924
    %v926 = vpop.xlane.xlu0 %925
    %vm927 = vcmp.eq.f32.partialorder %v919, %v926
    %v928 = vsel %vm927, %v64, 32
    %v929 = vsel %vm81, %v928, 2147483647
    %v930 = vand.u32 %v929, 65535
    %v931 = vshra.s32 %v929, 16
    %v932 = vcvt.s32.f32 %v930
    %v933 = vcvt.s32.f32 %v931
    %934 = vmin.xlane.f32.xlu0 %v933
    %v935 = vpop.xlane.xlu0 %934
    %vm936 = vcmp.eq.f32.partialorder %v933, %v935
    %v937 = vsel %vm936, %v932, inf
    %938 = vmin.xlane.f32.xlu0 %v937
    %v939 = vpop.xlane.xlu0 %938
    %v940 = vcvt.f32.s32 %v939
    %v941 = vcvt.f32.s32 %v935
    %v942 = vshll.u32 %v941, 16
    %v943 = vadd.s32 %v942, %v940
    %vm944 = vcmp.eq.s32.totalorder %v64, %v943
    %v945 = vsel %vm944, 1, 0
    %v946 = vcvt.s32.f32 %v945
    %v948 = vsel %vm81, %v946, 0
    %950 = vmatprep.subr.mxu0 0.0
    %951 = vmatpush1.msra.mxu0 %v59
    %952 = vmatprep.subr.mxu0 0.0
    %953 = vmatpush1.msra.mxu0 %v60
    %954 = vmatprep.subr.mxu0 0.0
    %955 = vmatpush1.msra.mxu0 %v61
    %956 = vmatprep.subr.mxu0 0.0
    %957 = vmatpush1.msra.mxu0 %v62
    %958 = vmatprep.subr.mxu0 0.0
    %959 = vmatpush1.msra.mxu0 0.0
    %960 = vmatprep.subr.mxu0 0.0
    %961 = vmatpush1.msra.mxu0 0.0
    %962 = vmatprep.subr.mxu0 0.0
    %963 = vmatpush1.msra.mxu0 0.0
    %964 = vmatprep.subr.mxu0 0.0
    %965 = vmatpush1.msra.mxu0 0.0
    %966 = vmatprep.subr.mxu0 0.0
    %967 = vmatpush1.msra.mxu0 0.0
    %968 = vmatprep.subr.mxu0 0.0
    %969 = vmatpush1.msra.mxu0 0.0
    %970 = vmatprep.subr.mxu0 0.0
    %971 = vmatpush1.msra.mxu0 0.0
    %972 = vmatprep.subr.mxu0 0.0
    %973 = vmatpush1.msra.mxu0 0.0
    %974 = vmatprep.subr.mxu0 0.0
    %975 = vmatpush1.msra.mxu0 0.0
    %976 = vmatprep.subr.mxu0 0.0
    %977 = vmatpush1.msra.mxu0 0.0
    %978 = vmatprep.subr.mxu0 0.0
    %979 = vmatpush1.msra.mxu0 0.0
    %980 = vmatprep.subr.mxu0 0.0
    %981 = vmatpush1.msra.mxu0 0.0
    %982 = vmatprep.subr.mxu0 0.0
    %983 = vmatpush1.msra.mxu0 0.0
    %984 = vmatprep.subr.mxu0 0.0
    %985 = vmatpush1.msra.mxu0 0.0
    %986 = vmatprep.subr.mxu0 0.0
    %987 = vmatpush1.msra.mxu0 0.0
    %988 = vmatprep.subr.mxu0 0.0
    %989 = vmatpush1.msra.mxu0 0.0
    %990 = vmatprep.subr.mxu0 0.0
    %991 = vmatpush1.msra.mxu0 0.0
    %992 = vmatprep.subr.mxu0 0.0
    %993 = vmatpush1.msra.mxu0 0.0
    %994 = vmatprep.subr.mxu0 0.0
    %995 = vmatpush1.msra.mxu0 0.0
    %996 = vmatprep.subr.mxu0 0.0
    %997 = vmatpush1.msra.mxu0 0.0
    %998 = vmatprep.subr.mxu0 0.0
    %999 = vmatpush1.msra.mxu0 0.0
    %1000 = vmatprep.subr.mxu0 0.0
    %1001 = vmatpush1.msra.mxu0 0.0
    %1002 = vmatprep.subr.mxu0 0.0
    %1003 = vmatpush1.msra.mxu0 0.0
    %1004 = vmatprep.subr.mxu0 0.0
    %1005 = vmatpush1.msra.mxu0 0.0
    %1006 = vmatprep.subr.mxu0 0.0
    %1007 = vmatpush1.msra.mxu0 0.0
    %1008 = vmatprep.subr.mxu0 0.0
    %1009 = vmatpush1.msra.mxu0 0.0
    %1010 = vmatprep.subr.mxu0 0.0
    %1011 = vmatpush1.msra.mxu0 0.0
    %1012 = vmatprep.subr.mxu0 0.0
    %1013 = vmatpush1.msra.mxu0 0.0
    %1014 = vmatprep.mubr.f32.mxu0 0.0
    %1015 = vmatmul.mubr.f32.gmra.mrb[0].mxu0 %v948
    %v1016 = vpop.f32.mrb[0].mxu0
    %v1017 = vadd.f32 0.0, %v1016
    %v1018 = vpop.f32.mrb[0].mxu0
    %1019 = vdwg.mxu0
    %s1020 = scalar_lea.vmem [#allocation2], 32
    %v1021 = vld [vmem:[%s1020] sm:$0xff]
    %1023 = vrot.lane.b32.xlu0 %v1021, 16
    %v1024 = vpop.permute.xlu0 %1023
    %1027 = vrot.lane.b32.xlu0 %v876, 64
    %v1028 = vpop.permute.xlu0 %1027
    %v1030 = vsel %vm79, %v1017, %v1024
    %v1031 = vsel %vm81, %v1030, %v1028
    %v1032 = vpack.c.bf16 %v1031, %v1031
    %v1034 = vsel %vm114, %v1032, 0
    %1036 = vmatprep.subr.bf16.mxu0 0
    %1037 = vmatpush1.bf16.msra.mxu0 %v106
    %1038 = vmatprep.subr.bf16.mxu0 0
    %1039 = vmatpush1.bf16.msra.mxu0 %v107
    %1040 = vmatprep.subr.bf16.mxu0 0
    %1041 = vmatpush1.bf16.msra.mxu0 %v108
    %1042 = vmatprep.subr.bf16.mxu0 0
    %1043 = vmatpush1.bf16.msra.mxu0 %v109
    %1044 = vmatprep.subr.bf16.mxu0 0
    %1045 = vmatpush1.bf16.msra.mxu0 0
    %1046 = vmatprep.subr.bf16.mxu0 0
    %1047 = vmatpush1.bf16.msra.mxu0 0
    %1048 = vmatprep.subr.bf16.mxu0 0
    %1049 = vmatpush1.bf16.msra.mxu0 0
    %1050 = vmatprep.subr.bf16.mxu0 0
    %1051 = vmatpush1.bf16.msra.mxu0 0
    %1052 = vmatprep.subr.bf16.mxu0 0
    %1053 = vmatpush1.bf16.msra.mxu0 0
    %1054 = vmatprep.subr.bf16.mxu0 0
    %1055 = vmatpush1.bf16.msra.mxu0 0
    %1056 = vmatprep.subr.bf16.mxu0 0
    %1057 = vmatpush1.bf16.msra.mxu0 0
    %1058 = vmatprep.subr.bf16.mxu0 0
    %1059 = vmatpush1.bf16.msra.mxu0 0
    %1060 = vmatprep.subr.bf16.mxu0 0
    %1061 = vmatpush1.bf16.msra.mxu0 0
    %1062 = vmatprep.subr.bf16.mxu0 0
    %1063 = vmatpush1.bf16.msra.mxu0 0
    %1064 = vmatprep.subr.bf16.mxu0 0
    %1065 = vmatpush1.bf16.msra.mxu0 0
    %1066 = vmatprep.subr.bf16.mxu0 0
    %1067 = vmatpush1.bf16.msra.mxu0 0
    %1068 = vmatprep.mubr.bf16.mxu0 0
    %1069 = vmatmul.mubr.bf16.gmra.mrb[0].mxu0 %v1034
    %v1070 = vpop.f32.mrb[0].mxu0
    %v1071 = vadd.f32 %v88, %v1070
    %v1072 = vpop.f32.mrb[0].mxu0
    %v1073 = vpop.f32.mrb[0].mxu0
    %v1074 = vpop.f32.mrb[0].mxu0
    %1075 = vdwg.mxu0
    %v1076 = vxor.u32 %v1071, 2147483648
    %v1077 = vmul.f32 %v1076, 1.442695
    %v1078 = vpow.pop %v1077
    %v1079 = vadd.f32 %v1078, 1.0
    %v1080 = vrcp.pop %v1079
    %v1081 = vmul.f32 1.0, %v1080
    %v1082 = vtanh.pop %v1071
    %v1083 = vsel %vm67, %v1082, %v1081
    %v1084 = vmul.f32 %v1083, %v870
    %1086 = vrot.lane.b32.xlu0 %v1083, 64
    %v1087 = vpop.permute.xlu0 %1086
    %v1089 = vmul.f32 %v1083, %v1087
    %1091 = vrot.lane.b32.xlu0 %v1089, 32
    %v1092 = vpop.permute.xlu0 %1091
    %v1094 = vadd.f32 %v1084, %v1092
    %v1095 = vtanh.pop %v1094
    %1097 = vrot.lane.b32.xlu0 %v1095, 64
    %v1098 = vpop.permute.xlu0 %1097
    %v1100 = vmul.f32 %v1083, %v1098
    %v1101 = vpack.c.bf16 %v1100, %v1100
    %1103 = vrot.lane.b32.xlu0 %v1101, 32
    %v1104 = vpop.permute.xlu0 %1103
    %v1106 = vsel %vm81, %v1104, 0
    %1108 = vmatprep.subr.bf16.mxu0 0
    %1109 = vmatpush1.bf16.msra.mxu0 %v205
    %1110 = vmatprep.subr.bf16.mxu0 0
    %1111 = vmatpush1.bf16.msra.mxu0 %v206
    %1112 = vmatprep.subr.bf16.mxu0 0
    %1113 = vmatpush1.bf16.msra.mxu0 0
    %1114 = vmatprep.subr.bf16.mxu0 0
    %1115 = vmatpush1.bf16.msra.mxu0 0
    %1116 = vmatprep.subr.bf16.mxu0 0
    %1117 = vmatpush1.bf16.msra.mxu0 0
    %1118 = vmatprep.subr.bf16.mxu0 0
    %1119 = vmatpush1.bf16.msra.mxu0 0
    %1120 = vmatprep.subr.bf16.mxu0 0
    %1121 = vmatpush1.bf16.msra.mxu0 0
    %1122 = vmatprep.subr.bf16.mxu0 0
    %1123 = vmatpush1.bf16.msra.mxu0 0
    %1124 = vmatprep.subr.bf16.mxu0 0
    %1125 = vmatpush1.bf16.msra.mxu0 0
    %1126 = vmatprep.subr.bf16.mxu0 0
    %1127 = vmatpush1.bf16.msra.mxu0 0
    %1128 = vmatprep.subr.bf16.mxu0 0
    %1129 = vmatpush1.bf16.msra.mxu0 0
    %1130 = vmatprep.subr.bf16.mxu0 0
    %1131 = vmatpush1.bf16.msra.mxu0 0
    %1132 = vmatprep.subr.bf16.mxu0 0
    %1133 = vmatpush1.bf16.msra.mxu0 0
    %1134 = vmatprep.subr.bf16.mxu0 0
    %1135 = vmatpush1.bf16.msra.mxu0 0
    %1136 = vmatprep.subr.bf16.mxu0 0
    %1137 = vmatpush1.bf16.msra.mxu0 0
    %1138 = vmatprep.subr.bf16.mxu0 0
    %1139 = vmatpush1.bf16.msra.mxu0 0
    %1140 = vmatprep.mubr.bf16.mxu0 0
    %1141 = vmatmul.mubr.bf16.gmra.mrb[0].mxu0 %v1106
    %v1142 = vpop.f32.mrb[0].mxu0
    %v1143 = vadd.f32 %v192, %v1142
    %v1144 = vpop.f32.mrb[0].mxu0
    %v1145 = vpop.f32.mrb[0].mxu0
    %v1146 = vpop.f32.mrb[0].mxu0
    %1147 = vdwg.mxu0
    %v1148 = vsel %vm81, %v1143, -inf
    %1149 = vmax.xlane.f32.xlu0 %v1148
    %v1150 = vpop.xlane.xlu0 %1149
    %vm1151 = vcmp.eq.f32.partialorder %v1143, %v1150
    %v1152 = vsel %vm1151, %v64, 32
    %v1153 = vsel %vm81, %v1152, 2147483647
    %v1154 = vand.u32 %v1153, 65535
    %v1155 = vshra.s32 %v1153, 16
    %v1156 = vcvt.s32.f32 %v1154
    %v1157 = vcvt.s32.f32 %v1155
    %1158 = vmin.xlane.f32.xlu0 %v1157
    %v1159 = vpop.xlane.xlu0 %1158
    %vm1160 = vcmp.eq.f32.partialorder %v1157, %v1159
    %v1161 = vsel %vm1160, %v1156, inf
    %1162 = vmin.xlane.f32.xlu0 %v1161
    %v1163 = vpop.xlane.xlu0 %1162
    %v1164 = vcvt.f32.s32 %v1163
    %v1165 = vcvt.f32.s32 %v1159
    %v1166 = vshll.u32 %v1165, 16
    %v1167 = vadd.s32 %v1166, %v1164
    %vm1168 = vcmp.eq.s32.totalorder %v64, %v1167
    %v1169 = vsel %vm1168, 1, 0
    %v1170 = vcvt.s32.f32 %v1169
    %v1172 = vsel %vm81, %v1170, 0
    %1174 = vmatprep.subr.mxu0 0.0
    %1175 = vmatpush1.msra.mxu0 %v59
    %1176 = vmatprep.subr.mxu0 0.0
    %1177 = vmatpush1.msra.mxu0 %v60
    %1178 = vmatprep.subr.mxu0 0.0
    %1179 = vmatpush1.msra.mxu0 %v61
    %1180 = vmatprep.subr.mxu0 0.0
    %1181 = vmatpush1.msra.mxu0 %v62
    %1182 = vmatprep.subr.mxu0 0.0
    %1183 = vmatpush1.msra.mxu0 0.0
    %1184 = vmatprep.subr.mxu0 0.0
    %1185 = vmatpush1.msra.mxu0 0.0
    %1186 = vmatprep.subr.mxu0 0.0
    %1187 = vmatpush1.msra.mxu0 0.0
    %1188 = vmatprep.subr.mxu0 0.0
    %1189 = vmatpush1.msra.mxu0 0.0
    %1190 = vmatprep.subr.mxu0 0.0
    %1191 = vmatpush1.msra.mxu0 0.0
    %1192 = vmatprep.subr.mxu0 0.0
    %1193 = vmatpush1.msra.mxu0 0.0
    %1194 = vmatprep.subr.mxu0 0.0
    %1195 = vmatpush1.msra.mxu0 0.0
    %1196 = vmatprep.subr.mxu0 0.0
    %1197 = vmatpush1.msra.mxu0 0.0
    %1198 = vmatprep.subr.mxu0 0.0
    %1199 = vmatpush1.msra.mxu0 0.0
    %1200 = vmatprep.subr.mxu0 0.0
    %1201 = vmatpush1.msra.mxu0 0.0
    %1202 = vmatprep.subr.mxu0 0.0
    %1203 = vmatpush1.msra.mxu0 0.0
    %1204 = vmatprep.subr.mxu0 0.0
    %1205 = vmatpush1.msra.mxu0 0.0
    %1206 = vmatprep.subr.mxu0 0.0
    %1207 = vmatpush1.msra.mxu0 0.0
    %1208 = vmatprep.subr.mxu0 0.0
    %1209 = vmatpush1.msra.mxu0 0.0
    %1210 = vmatprep.subr.mxu0 0.0
    %1211 = vmatpush1.msra.mxu0 0.0
    %1212 = vmatprep.subr.mxu0 0.0
    %1213 = vmatpush1.msra.mxu0 0.0
    %1214 = vmatprep.subr.mxu0 0.0
    %1215 = vmatpush1.msra.mxu0 0.0
    %1216 = vmatprep.subr.mxu0 0.0
    %1217 = vmatpush1.msra.mxu0 0.0
    %1218 = vmatprep.subr.mxu0 0.0
    %1219 = vmatpush1.msra.mxu0 0.0
    %1220 = vmatprep.subr.mxu0 0.0
    %1221 = vmatpush1.msra.mxu0 0.0
    %1222 = vmatprep.subr.mxu0 0.0
    %1223 = vmatpush1.msra.mxu0 0.0
    %1224 = vmatprep.subr.mxu0 0.0
    %1225 = vmatpush1.msra.mxu0 0.0
    %1226 = vmatprep.subr.mxu0 0.0
    %1227 = vmatpush1.msra.mxu0 0.0
    %1228 = vmatprep.subr.mxu0 0.0
    %1229 = vmatpush1.msra.mxu0 0.0
    %1230 = vmatprep.subr.mxu0 0.0
    %1231 = vmatpush1.msra.mxu0 0.0
    %1232 = vmatprep.subr.mxu0 0.0
    %1233 = vmatpush1.msra.mxu0 0.0
    %1234 = vmatprep.subr.mxu0 0.0
    %1235 = vmatpush1.msra.mxu0 0.0
    %1236 = vmatprep.subr.mxu0 0.0
    %1237 = vmatpush1.msra.mxu0 0.0
    %1238 = vmatprep.mubr.f32.mxu0 0.0
    %1239 = vmatmul.mubr.f32.gmra.mrb[0].mxu0 %v1172
    %v1240 = vpop.f32.mrb[0].mxu0
    %v1241 = vadd.f32 0.0, %v1240
    %v1242 = vpop.f32.mrb[0].mxu0
    %1243 = vdwg.mxu0
    %s1244 = scalar_lea.vmem [#allocation2], 40
    %v1245 = vld [vmem:[%s1244] sm:$0xff]
    %1247 = vrot.lane.b32.xlu0 %v1245, 16
    %v1248 = vpop.permute.xlu0 %1247
    %1251 = vrot.lane.b32.xlu0 %v1100, 64
    %v1252 = vpop.permute.xlu0 %1251
    %v1254 = vsel %vm79, %v1241, %v1248
    %v1255 = vsel %vm81, %v1254, %v1252
    %v1256 = vpack.c.bf16 %v1255, %v1255
    %v1258 = vsel %vm114, %v1256, 0
    %1260 = vmatprep.subr.bf16.mxu0 0
    %1261 = vmatpush1.bf16.msra.mxu0 %v106
    %1262 = vmatprep.subr.bf16.mxu0 0
    %1263 = vmatpush1.bf16.msra.mxu0 %v107
    %1264 = vmatprep.subr.bf16.mxu0 0
    %1265 = vmatpush1.bf16.msra.mxu0 %v108
    %1266 = vmatprep.subr.bf16.mxu0 0
    %1267 = vmatpush1.bf16.msra.mxu0 %v109
    %1268 = vmatprep.subr.bf16.mxu0 0
    %1269 = vmatpush1.bf16.msra.mxu0 0
    %1270 = vmatprep.subr.bf16.mxu0 0
    %1271 = vmatpush1.bf16.msra.mxu0 0
    %1272 = vmatprep.subr.bf16.mxu0 0
    %1273 = vmatpush1.bf16.msra.mxu0 0
    %1274 = vmatprep.subr.bf16.mxu0 0
    %1275 = vmatpush1.bf16.msra.mxu0 0
    %1276 = vmatprep.subr.bf16.mxu0 0
    %1277 = vmatpush1.bf16.msra.mxu0 0
    %1278 = vmatprep.subr.bf16.mxu0 0
    %1279 = vmatpush1.bf16.msra.mxu0 0
    %1280 = vmatprep.subr.bf16.mxu0 0
    %1281 = vmatpush1.bf16.msra.mxu0 0
    %1282 = vmatprep.subr.bf16.mxu0 0
    %1283 = vmatpush1.bf16.msra.mxu0 0
    %1284 = vmatprep.subr.bf16.mxu0 0
    %1285 = vmatpush1.bf16.msra.mxu0 0
    %1286 = vmatprep.subr.bf16.mxu0 0
    %1287 = vmatpush1.bf16.msra.mxu0 0
    %1288 = vmatprep.subr.bf16.mxu0 0
    %1289 = vmatpush1.bf16.msra.mxu0 0
    %1290 = vmatprep.subr.bf16.mxu0 0
    %1291 = vmatpush1.bf16.msra.mxu0 0
    %1292 = vmatprep.mubr.bf16.mxu0 0
    %1293 = vmatmul.mubr.bf16.gmra.mrb[0].mxu0 %v1258
    %v1294 = vpop.f32.mrb[0].mxu0
    %v1295 = vadd.f32 %v88, %v1294
    %v1296 = vpop.f32.mrb[0].mxu0
    %v1297 = vpop.f32.mrb[0].mxu0
    %v1298 = vpop.f32.mrb[0].mxu0
    %1299 = vdwg.mxu0
    %v1300 = vxor.u32 %v1295, 2147483648
    %v1301 = vmul.f32 %v1300, 1.442695
    %v1302 = vpow.pop %v1301
    %v1303 = vadd.f32 %v1302, 1.0
    %v1304 = vrcp.pop %v1303
    %v1305 = vmul.f32 1.0, %v1304
    %v1306 = vtanh.pop %v1295
    %v1307 = vsel %vm67, %v1306, %v1305
    %v1308 = vmul.f32 %v1307, %v1094
    %1310 = vrot.lane.b32.xlu0 %v1307, 64
    %v1311 = vpop.permute.xlu0 %1310
    %v1313 = vmul.f32 %v1307, %v1311
    %1315 = vrot.lane.b32.xlu0 %v1313, 32
    %v1316 = vpop.permute.xlu0 %1315
    %v1318 = vadd.f32 %v1308, %v1316
    %v1319 = vtanh.pop %v1318
    %1321 = vrot.lane.b32.xlu0 %v1319, 64
    %v1322 = vpop.permute.xlu0 %1321
    %v1324 = vmul.f32 %v1307, %v1322
    %v1325 = vpack.c.bf16 %v1324, %v1324
    %1327 = vrot.lane.b32.xlu0 %v1325, 32
    %v1328 = vpop.permute.xlu0 %1327
    %v1330 = vsel %vm81, %v1328, 0
    %1332 = vmatprep.subr.bf16.mxu0 0
    %1333 = vmatpush1.bf16.msra.mxu0 %v205
    %1334 = vmatprep.subr.bf16.mxu0 0
    %1335 = vmatpush1.bf16.msra.mxu0 %v206
    %1336 = vmatprep.subr.bf16.mxu0 0
    %1337 = vmatpush1.bf16.msra.mxu0 0
    %1338 = vmatprep.subr.bf16.mxu0 0
    %1339 = vmatpush1.bf16.msra.mxu0 0
    %1340 = vmatprep.subr.bf16.mxu0 0
    %1341 = vmatpush1.bf16.msra.mxu0 0
    %1342 = vmatprep.subr.bf16.mxu0 0
    %1343 = vmatpush1.bf16.msra.mxu0 0
    %1344 = vmatprep.subr.bf16.mxu0 0
    %1345 = vmatpush1.bf16.msra.mxu0 0
    %1346 = vmatprep.subr.bf16.mxu0 0
    %1347 = vmatpush1.bf16.msra.mxu0 0
    %1348 = vmatprep.subr.bf16.mxu0 0
    %1349 = vmatpush1.bf16.msra.mxu0 0
    %1350 = vmatprep.subr.bf16.mxu0 0
    %1351 = vmatpush1.bf16.msra.mxu0 0
    %1352 = vmatprep.subr.bf16.mxu0 0
    %1353 = vmatpush1.bf16.msra.mxu0 0
    %1354 = vmatprep.subr.bf16.mxu0 0
    %1355 = vmatpush1.bf16.msra.mxu0 0
    %1356 = vmatprep.subr.bf16.mxu0 0
    %1357 = vmatpush1.bf16.msra.mxu0 0
    %1358 = vmatprep.subr.bf16.mxu0 0
    %1359 = vmatpush1.bf16.msra.mxu0 0
    %1360 = vmatprep.subr.bf16.mxu0 0
    %1361 = vmatpush1.bf16.msra.mxu0 0
    %1362 = vmatprep.subr.bf16.mxu0 0
    %1363 = vmatpush1.bf16.msra.mxu0 0
    %1364 = vmatprep.mubr.bf16.mxu0 0
    %1365 = vmatmul.mubr.bf16.gmra.mrb[0].mxu0 %v1330
    %v1366 = vpop.f32.mrb[0].mxu0
    %v1367 = vadd.f32 %v192, %v1366
    %v1368 = vpop.f32.mrb[0].mxu0
    %v1369 = vpop.f32.mrb[0].mxu0
    %v1370 = vpop.f32.mrb[0].mxu0
    %1371 = vdwg.mxu0
    %v1372 = vsel %vm81, %v1367, -inf
    %1373 = vmax.xlane.f32.xlu0 %v1372
    %v1374 = vpop.xlane.xlu0 %1373
    %vm1375 = vcmp.eq.f32.partialorder %v1367, %v1374
    %v1376 = vsel %vm1375, %v64, 32
    %v1377 = vsel %vm81, %v1376, 2147483647
    %v1378 = vand.u32 %v1377, 65535
    %v1379 = vshra.s32 %v1377, 16
    %v1380 = vcvt.s32.f32 %v1378
    %v1381 = vcvt.s32.f32 %v1379
    %1382 = vmin.xlane.f32.xlu0 %v1381
    %v1383 = vpop.xlane.xlu0 %1382
    %vm1384 = vcmp.eq.f32.partialorder %v1381, %v1383
    %v1385 = vsel %vm1384, %v1380, inf
    %1386 = vmin.xlane.f32.xlu0 %v1385
    %v1387 = vpop.xlane.xlu0 %1386
    %v1388 = vcvt.f32.s32 %v1387
    %v1389 = vcvt.f32.s32 %v1383
    %v1390 = vshll.u32 %v1389, 16
    %v1391 = vadd.s32 %v1390, %v1388
    %vm1392 = vcmp.eq.s32.totalorder %v64, %v1391
    %v1393 = vsel %vm1392, 1, 0
    %v1394 = vcvt.s32.f32 %v1393
    %v1396 = vsel %vm81, %v1394, 0
    %1398 = vmatprep.subr.mxu0 0.0
    %1399 = vmatpush1.msra.mxu0 %v59
    %1400 = vmatprep.subr.mxu0 0.0
    %1401 = vmatpush1.msra.mxu0 %v60
    %1402 = vmatprep.subr.mxu0 0.0
    %1403 = vmatpush1.msra.mxu0 %v61
    %1404 = vmatprep.subr.mxu0 0.0
    %1405 = vmatpush1.msra.mxu0 %v62
    %1406 = vmatprep.subr.mxu0 0.0
    %1407 = vmatpush1.msra.mxu0 0.0
    %1408 = vmatprep.subr.mxu0 0.0
    %1409 = vmatpush1.msra.mxu0 0.0
    %1410 = vmatprep.subr.mxu0 0.0
    %1411 = vmatpush1.msra.mxu0 0.0
    %1412 = vmatprep.subr.mxu0 0.0
    %1413 = vmatpush1.msra.mxu0 0.0
    %1414 = vmatprep.subr.mxu0 0.0
    %1415 = vmatpush1.msra.mxu0 0.0
    %1416 = vmatprep.subr.mxu0 0.0
    %1417 = vmatpush1.msra.mxu0 0.0
    %1418 = vmatprep.subr.mxu0 0.0
    %1419 = vmatpush1.msra.mxu0 0.0
    %1420 = vmatprep.subr.mxu0 0.0
    %1421 = vmatpush1.msra.mxu0 0.0
    %1422 = vmatprep.subr.mxu0 0.0
    %1423 = vmatpush1.msra.mxu0 0.0
    %1424 = vmatprep.subr.mxu0 0.0
    %1425 = vmatpush1.msra.mxu0 0.0
    %1426 = vmatprep.subr.mxu0 0.0
    %1427 = vmatpush1.msra.mxu0 0.0
    %1428 = vmatprep.subr.mxu0 0.0
    %1429 = vmatpush1.msra.mxu0 0.0
    %1430 = vmatprep.subr.mxu0 0.0
    %1431 = vmatpush1.msra.mxu0 0.0
    %1432 = vmatprep.subr.mxu0 0.0
    %1433 = vmatpush1.msra.mxu0 0.0
    %1434 = vmatprep.subr.mxu0 0.0
    %1435 = vmatpush1.msra.mxu0 0.0
    %1436 = vmatprep.subr.mxu0 0.0
    %1437 = vmatpush1.msra.mxu0 0.0
    %1438 = vmatprep.subr.mxu0 0.0
    %1439 = vmatpush1.msra.mxu0 0.0
    %1440 = vmatprep.subr.mxu0 0.0
    %1441 = vmatpush1.msra.mxu0 0.0
    %1442 = vmatprep.subr.mxu0 0.0
    %1443 = vmatpush1.msra.mxu0 0.0
    %1444 = vmatprep.subr.mxu0 0.0
    %1445 = vmatpush1.msra.mxu0 0.0
    %1446 = vmatprep.subr.mxu0 0.0
    %1447 = vmatpush1.msra.mxu0 0.0
    %1448 = vmatprep.subr.mxu0 0.0
    %1449 = vmatpush1.msra.mxu0 0.0
    %1450 = vmatprep.subr.mxu0 0.0
    %1451 = vmatpush1.msra.mxu0 0.0
    %1452 = vmatprep.subr.mxu0 0.0
    %1453 = vmatpush1.msra.mxu0 0.0
    %1454 = vmatprep.subr.mxu0 0.0
    %1455 = vmatpush1.msra.mxu0 0.0
    %1456 = vmatprep.subr.mxu0 0.0
    %1457 = vmatpush1.msra.mxu0 0.0
    %1458 = vmatprep.subr.mxu0 0.0
    %1459 = vmatpush1.msra.mxu0 0.0
    %1460 = vmatprep.subr.mxu0 0.0
    %1461 = vmatpush1.msra.mxu0 0.0
    %1462 = vmatprep.mubr.f32.mxu0 0.0
    %1463 = vmatmul.mubr.f32.gmra.mrb[0].mxu0 %v1396
    %v1464 = vpop.f32.mrb[0].mxu0
    %v1465 = vadd.f32 0.0, %v1464
    %v1466 = vpop.f32.mrb[0].mxu0
    %1467 = vdwg.mxu0
    %s1468 = scalar_lea.vmem [#allocation2], 48
    %v1469 = vld [vmem:[%s1468] sm:$0xff]
    %1471 = vrot.lane.b32.xlu0 %v1469, 16
    %v1472 = vpop.permute.xlu0 %1471
    %1475 = vrot.lane.b32.xlu0 %v1324, 64
    %v1476 = vpop.permute.xlu0 %1475
    %v1478 = vsel %vm79, %v1465, %v1472
    %v1479 = vsel %vm81, %v1478, %v1476
    %v1480 = vpack.c.bf16 %v1479, %v1479
    %v1482 = vsel %vm114, %v1480, 0
    %1484 = vmatprep.subr.bf16.mxu0 0
    %1485 = vmatpush1.bf16.msra.mxu0 %v106
    %1486 = vmatprep.subr.bf16.mxu0 0
    %1487 = vmatpush1.bf16.msra.mxu0 %v107
    %1488 = vmatprep.subr.bf16.mxu0 0
    %1489 = vmatpush1.bf16.msra.mxu0 %v108
    %1490 = vmatprep.subr.bf16.mxu0 0
    %1491 = vmatpush1.bf16.msra.mxu0 %v109
    %1492 = vmatprep.subr.bf16.mxu0 0
    %1493 = vmatpush1.bf16.msra.mxu0 0
    %1494 = vmatprep.subr.bf16.mxu0 0
    %1495 = vmatpush1.bf16.msra.mxu0 0
    %1496 = vmatprep.subr.bf16.mxu0 0
    %1497 = vmatpush1.bf16.msra.mxu0 0
    %1498 = vmatprep.subr.bf16.mxu0 0
    %1499 = vmatpush1.bf16.msra.mxu0 0
    %1500 = vmatprep.subr.bf16.mxu0 0
    %1501 = vmatpush1.bf16.msra.mxu0 0
    %1502 = vmatprep.subr.bf16.mxu0 0
    %1503 = vmatpush1.bf16.msra.mxu0 0
    %1504 = vmatprep.subr.bf16.mxu0 0
    %1505 = vmatpush1.bf16.msra.mxu0 0
    %1506 = vmatprep.subr.bf16.mxu0 0
    %1507 = vmatpush1.bf16.msra.mxu0 0
    %1508 = vmatprep.subr.bf16.mxu0 0
    %1509 = vmatpush1.bf16.msra.mxu0 0
    %1510 = vmatprep.subr.bf16.mxu0 0
    %1511 = vmatpush1.bf16.msra.mxu0 0
    %1512 = vmatprep.subr.bf16.mxu0 0
    %1513 = vmatpush1.bf16.msra.mxu0 0
    %1514 = vmatprep.subr.bf16.mxu0 0
    %1515 = vmatpush1.bf16.msra.mxu0 0
    %1516 = vmatprep.mubr.bf16.mxu0 0
    %1517 = vmatmul.mubr.bf16.gmra.mrb[0].mxu0 %v1482
    %v1518 = vpop.f32.mrb[0].mxu0
    %v1519 = vadd.f32 %v88, %v1518
    %v1520 = vpop.f32.mrb[0].mxu0
    %v1521 = vpop.f32.mrb[0].mxu0
    %v1522 = vpop.f32.mrb[0].mxu0
    %1523 = vdwg.mxu0
    %v1524 = vxor.u32 %v1519, 2147483648
    %v1525 = vmul.f32 %v1524, 1.442695
    %v1526 = vpow.pop %v1525
    %v1527 = vadd.f32 %v1526, 1.0
    %v1528 = vrcp.pop %v1527
    %v1529 = vmul.f32 1.0, %v1528
    %v1530 = vtanh.pop %v1519
    %v1531 = vsel %vm67, %v1530, %v1529
    %v1532 = vmul.f32 %v1531, %v1318
    %1534 = vrot.lane.b32.xlu0 %v1531, 64
    %v1535 = vpop.permute.xlu0 %1534
    %v1537 = vmul.f32 %v1531, %v1535
    %1539 = vrot.lane.b32.xlu0 %v1537, 32
    %v1540 = vpop.permute.xlu0 %1539
    %v1542 = vadd.f32 %v1532, %v1540
    %v1543 = vtanh.pop %v1542
    %1545 = vrot.lane.b32.xlu0 %v1543, 64
    %v1546 = vpop.permute.xlu0 %1545
    %v1548 = vmul.f32 %v1531, %v1546
    %v1549 = vpack.c.bf16 %v1548, %v1548
    %1551 = vrot.lane.b32.xlu0 %v1549, 32
    %v1552 = vpop.permute.xlu0 %1551
    %v1554 = vsel %vm81, %v1552, 0
    %1556 = vmatprep.subr.bf16.mxu0 0
    %1557 = vmatpush1.bf16.msra.mxu0 %v205
    %1558 = vmatprep.subr.bf16.mxu0 0
    %1559 = vmatpush1.bf16.msra.mxu0 %v206
    %1560 = vmatprep.subr.bf16.mxu0 0
    %1561 = vmatpush1.bf16.msra.mxu0 0
    %1562 = vmatprep.subr.bf16.mxu0 0
    %1563 = vmatpush1.bf16.msra.mxu0 0
    %1564 = vmatprep.subr.bf16.mxu0 0
    %1565 = vmatpush1.bf16.msra.mxu0 0
    %1566 = vmatprep.subr.bf16.mxu0 0
    %1567 = vmatpush1.bf16.msra.mxu0 0
    %1568 = vmatprep.subr.bf16.mxu0 0
    %1569 = vmatpush1.bf16.msra.mxu0 0
    %1570 = vmatprep.subr.bf16.mxu0 0
    %1571 = vmatpush1.bf16.msra.mxu0 0
    %1572 = vmatprep.subr.bf16.mxu0 0
    %1573 = vmatpush1.bf16.msra.mxu0 0
    %1574 = vmatprep.subr.bf16.mxu0 0
    %1575 = vmatpush1.bf16.msra.mxu0 0
    %1576 = vmatprep.subr.bf16.mxu0 0
    %1577 = vmatpush1.bf16.msra.mxu0 0
    %1578 = vmatprep.subr.bf16.mxu0 0
    %1579 = vmatpush1.bf16.msra.mxu0 0
    %1580 = vmatprep.subr.bf16.mxu0 0
    %1581 = vmatpush1.bf16.msra.mxu0 0
    %1582 = vmatprep.subr.bf16.mxu0 0
    %1583 = vmatpush1.bf16.msra.mxu0 0
    %1584 = vmatprep.subr.bf16.mxu0 0
    %1585 = vmatpush1.bf16.msra.mxu0 0
    %1586 = vmatprep.subr.bf16.mxu0 0
    %1587 = vmatpush1.bf16.msra.mxu0 0
    %1588 = vmatprep.mubr.bf16.mxu0 0
    %1589 = vmatmul.mubr.bf16.gmra.mrb[0].mxu0 %v1554
    %v1590 = vpop.f32.mrb[0].mxu0
    %v1591 = vadd.f32 %v192, %v1590
    %v1592 = vpop.f32.mrb[0].mxu0
    %v1593 = vpop.f32.mrb[0].mxu0
    %v1594 = vpop.f32.mrb[0].mxu0
    %1595 = vdwg.mxu0
    %v1596 = vsel %vm81, %v1591, -inf
    %1597 = vmax.xlane.f32.xlu0 %v1596
    %v1598 = vpop.xlane.xlu0 %1597
    %vm1599 = vcmp.eq.f32.partialorder %v1591, %v1598
    %v1600 = vsel %vm1599, %v64, 32
    %v1601 = vsel %vm81, %v1600, 2147483647
    %v1602 = vand.u32 %v1601, 65535
    %v1603 = vshra.s32 %v1601, 16
    %v1604 = vcvt.s32.f32 %v1602
    %v1605 = vcvt.s32.f32 %v1603
    %1606 = vmin.xlane.f32.xlu0 %v1605
    %v1607 = vpop.xlane.xlu0 %1606
    %vm1608 = vcmp.eq.f32.partialorder %v1605, %v1607
    %v1609 = vsel %vm1608, %v1604, inf
    %1610 = vmin.xlane.f32.xlu0 %v1609
    %v1611 = vpop.xlane.xlu0 %1610
    %v1612 = vcvt.f32.s32 %v1611
    %v1613 = vcvt.f32.s32 %v1607
    %v1614 = vshll.u32 %v1613, 16
    %v1615 = vadd.s32 %v1614, %v1612
    %vm1616 = vcmp.eq.s32.totalorder %v64, %v1615
    %v1617 = vsel %vm1616, 1, 0
    %v1618 = vcvt.s32.f32 %v1617
    %v1620 = vsel %vm81, %v1618, 0
    %1622 = vmatprep.subr.mxu0 0.0
    %1623 = vmatpush1.msra.mxu0 %v59
    %1624 = vmatprep.subr.mxu0 0.0
    %1625 = vmatpush1.msra.mxu0 %v60
    %1626 = vmatprep.subr.mxu0 0.0
    %1627 = vmatpush1.msra.mxu0 %v61
    %1628 = vmatprep.subr.mxu0 0.0
    %1629 = vmatpush1.msra.mxu0 %v62
    %1630 = vmatprep.subr.mxu0 0.0
    %1631 = vmatpush1.msra.mxu0 0.0
    %1632 = vmatprep.subr.mxu0 0.0
    %1633 = vmatpush1.msra.mxu0 0.0
    %1634 = vmatprep.subr.mxu0 0.0
    %1635 = vmatpush1.msra.mxu0 0.0
    %1636 = vmatprep.subr.mxu0 0.0
    %1637 = vmatpush1.msra.mxu0 0.0
    %1638 = vmatprep.subr.mxu0 0.0
    %1639 = vmatpush1.msra.mxu0 0.0
    %1640 = vmatprep.subr.mxu0 0.0
    %1641 = vmatpush1.msra.mxu0 0.0
    %1642 = vmatprep.subr.mxu0 0.0
    %1643 = vmatpush1.msra.mxu0 0.0
    %1644 = vmatprep.subr.mxu0 0.0
    %1645 = vmatpush1.msra.mxu0 0.0
    %1646 = vmatprep.subr.mxu0 0.0
    %1647 = vmatpush1.msra.mxu0 0.0
    %1648 = vmatprep.subr.mxu0 0.0
    %1649 = vmatpush1.msra.mxu0 0.0
    %1650 = vmatprep.subr.mxu0 0.0
    %1651 = vmatpush1.msra.mxu0 0.0
    %1652 = vmatprep.subr.mxu0 0.0
    %1653 = vmatpush1.msra.mxu0 0.0
    %1654 = vmatprep.subr.mxu0 0.0
    %1655 = vmatpush1.msra.mxu0 0.0
    %1656 = vmatprep.subr.mxu0 0.0
    %1657 = vmatpush1.msra.mxu0 0.0
    %1658 = vmatprep.subr.mxu0 0.0
    %1659 = vmatpush1.msra.mxu0 0.0
    %1660 = vmatprep.subr.mxu0 0.0
    %1661 = vmatpush1.msra.mxu0 0.0
    %1662 = vmatprep.subr.mxu0 0.0
    %1663 = vmatpush1.msra.mxu0 0.0
    %1664 = vmatprep.subr.mxu0 0.0
    %1665 = vmatpush1.msra.mxu0 0.0
    %1666 = vmatprep.subr.mxu0 0.0
    %1667 = vmatpush1.msra.mxu0 0.0
    %1668 = vmatprep.subr.mxu0 0.0
    %1669 = vmatpush1.msra.mxu0 0.0
    %1670 = vmatprep.subr.mxu0 0.0
    %1671 = vmatpush1.msra.mxu0 0.0
    %1672 = vmatprep.subr.mxu0 0.0
    %1673 = vmatpush1.msra.mxu0 0.0
    %1674 = vmatprep.subr.mxu0 0.0
    %1675 = vmatpush1.msra.mxu0 0.0
    %1676 = vmatprep.subr.mxu0 0.0
    %1677 = vmatpush1.msra.mxu0 0.0
    %1678 = vmatprep.subr.mxu0 0.0
    %1679 = vmatpush1.msra.mxu0 0.0
    %1680 = vmatprep.subr.mxu0 0.0
    %1681 = vmatpush1.msra.mxu0 0.0
    %1682 = vmatprep.subr.mxu0 0.0
    %1683 = vmatpush1.msra.mxu0 0.0
    %1684 = vmatprep.subr.mxu0 0.0
    %1685 = vmatpush1.msra.mxu0 0.0
    %1686 = vmatprep.mubr.f32.mxu0 0.0
    %1687 = vmatmul.mubr.f32.gmra.mrb[0].mxu0 %v1620
    %v1688 = vpop.f32.mrb[0].mxu0
    %v1689 = vadd.f32 0.0, %v1688
    %v1690 = vpop.f32.mrb[0].mxu0
    %1691 = vdwg.mxu0
    %s1692 = scalar_lea.vmem [#allocation2], 56
    %v1693 = vld [vmem:[%s1692] sm:$0xff]
    %1695 = vrot.lane.b32.xlu0 %v1693, 16
    %v1696 = vpop.permute.xlu0 %1695
    %1699 = vrot.lane.b32.xlu0 %v1548, 64
    %v1700 = vpop.permute.xlu0 %1699
    %v1702 = vsel %vm79, %v1689, %v1696
    %v1703 = vsel %vm81, %v1702, %v1700
    %v1704 = vpack.c.bf16 %v1703, %v1703
    %v1706 = vsel %vm114, %v1704, 0
    %1708 = vmatprep.subr.bf16.mxu0 0
    %1709 = vmatpush1.bf16.msra.mxu0 %v106
    %1710 = vmatprep.subr.bf16.mxu0 0
    %1711 = vmatpush1.bf16.msra.mxu0 %v107
    %1712 = vmatprep.subr.bf16.mxu0 0
    %1713 = vmatpush1.bf16.msra.mxu0 %v108
    %1714 = vmatprep.subr.bf16.mxu0 0
    %1715 = vmatpush1.bf16.msra.mxu0 %v109
    %1716 = vmatprep.subr.bf16.mxu0 0
    %1717 = vmatpush1.bf16.msra.mxu0 0
    %1718 = vmatprep.subr.bf16.mxu0 0
    %1719 = vmatpush1.bf16.msra.mxu0 0
    %1720 = vmatprep.subr.bf16.mxu0 0
    %1721 = vmatpush1.bf16.msra.mxu0 0
    %1722 = vmatprep.subr.bf16.mxu0 0
    %1723 = vmatpush1.bf16.msra.mxu0 0
    %1724 = vmatprep.subr.bf16.mxu0 0
    %1725 = vmatpush1.bf16.msra.mxu0 0
    %1726 = vmatprep.subr.bf16.mxu0 0
    %1727 = vmatpush1.bf16.msra.mxu0 0
    %1728 = vmatprep.subr.bf16.mxu0 0
    %1729 = vmatpush1.bf16.msra.mxu0 0
    %1730 = vmatprep.subr.bf16.mxu0 0
    %1731 = vmatpush1.bf16.msra.mxu0 0
    %1732 = vmatprep.subr.bf16.mxu0 0
    %1733 = vmatpush1.bf16.msra.mxu0 0
    %1734 = vmatprep.subr.bf16.mxu0 0
    %1735 = vmatpush1.bf16.msra.mxu0 0
    %1736 = vmatprep.subr.bf16.mxu0 0
    %1737 = vmatpush1.bf16.msra.mxu0 0
    %1738 = vmatprep.subr.bf16.mxu0 0
    %1739 = vmatpush1.bf16.msra.mxu0 0
    %1740 = vmatprep.mubr.bf16.mxu0 0
    %1741 = vmatmul.mubr.bf16.gmra.mrb[0].mxu0 %v1706
    %v1742 = vpop.f32.mrb[0].mxu0
    %v1743 = vadd.f32 %v88, %v1742
    %v1744 = vpop.f32.mrb[0].mxu0
    %v1745 = vpop.f32.mrb[0].mxu0
    %v1746 = vpop.f32.mrb[0].mxu0
    %1747 = vdwg.mxu0
    %v1748 = vxor.u32 %v1743, 2147483648
    %v1749 = vmul.f32 %v1748, 1.442695
    %v1750 = vpow.pop %v1749
    %v1751 = vadd.f32 %v1750, 1.0
    %v1752 = vrcp.pop %v1751
    %v1753 = vmul.f32 1.0, %v1752
    %v1754 = vtanh.pop %v1743
    %v1755 = vsel %vm67, %v1754, %v1753
    %v1756 = vmul.f32 %v1755, %v1542
    %1758 = vrot.lane.b32.xlu0 %v1755, 64
    %v1759 = vpop.permute.xlu0 %1758
    %v1761 = vmul.f32 %v1755, %v1759
    %1763 = vrot.lane.b32.xlu0 %v1761, 32
    %v1764 = vpop.permute.xlu0 %1763
    %v1766 = vadd.f32 %v1756, %v1764
    %v1767 = vtanh.pop %v1766
    %1769 = vrot.lane.b32.xlu0 %v1767, 64
    %v1770 = vpop.permute.xlu0 %1769
    %v1772 = vmul.f32 %v1755, %v1770
    %v1773 = vpack.c.bf16 %v1772, %v1772
    %1775 = vrot.lane.b32.xlu0 %v1773, 32
    %v1776 = vpop.permute.xlu0 %1775
    %v1778 = vsel %vm81, %v1776, 0
    %1780 = vmatprep.subr.bf16.mxu0 0
    %1781 = vmatpush1.bf16.msra.mxu0 %v205
    %1782 = vmatprep.subr.bf16.mxu0 0
    %1783 = vmatpush1.bf16.msra.mxu0 %v206
    %1784 = vmatprep.subr.bf16.mxu0 0
    %1785 = vmatpush1.bf16.msra.mxu0 0
    %1786 = vmatprep.subr.bf16.mxu0 0
    %1787 = vmatpush1.bf16.msra.mxu0 0
    %1788 = vmatprep.subr.bf16.mxu0 0
    %1789 = vmatpush1.bf16.msra.mxu0 0
    %1790 = vmatprep.subr.bf16.mxu0 0
    %1791 = vmatpush1.bf16.msra.mxu0 0
    %1792 = vmatprep.subr.bf16.mxu0 0
    %1793 = vmatpush1.bf16.msra.mxu0 0
    %1794 = vmatprep.subr.bf16.mxu0 0
    %1795 = vmatpush1.bf16.msra.mxu0 0
    %1796 = vmatprep.subr.bf16.mxu0 0
    %1797 = vmatpush1.bf16.msra.mxu0 0
    %1798 = vmatprep.subr.bf16.mxu0 0
    %1799 = vmatpush1.bf16.msra.mxu0 0
    %1800 = vmatprep.subr.bf16.mxu0 0
    %1801 = vmatpush1.bf16.msra.mxu0 0
    %1802 = vmatprep.subr.bf16.mxu0 0
    %1803 = vmatpush1.bf16.msra.mxu0 0
    %1804 = vmatprep.subr.bf16.mxu0 0
    %1805 = vmatpush1.bf16.msra.mxu0 0
    %1806 = vmatprep.subr.bf16.mxu0 0
    %1807 = vmatpush1.bf16.msra.mxu0 0
    %1808 = vmatprep.subr.bf16.mxu0 0
    %1809 = vmatpush1.bf16.msra.mxu0 0
    %1810 = vmatprep.subr.bf16.mxu0 0
    %1811 = vmatpush1.bf16.msra.mxu0 0
    %1812 = vmatprep.mubr.bf16.mxu0 0
    %1813 = vmatmul.mubr.bf16.gmra.mrb[0].mxu0 %v1778
    %v1814 = vpop.f32.mrb[0].mxu0
    %v1815 = vadd.f32 %v192, %v1814
    %v1816 = vpop.f32.mrb[0].mxu0
    %v1817 = vpop.f32.mrb[0].mxu0
    %v1818 = vpop.f32.mrb[0].mxu0
    %1819 = vdwg.mxu0
    %1820 = vst.msk [vmem:[#allocation5] sm:$0xff] %vm81, %v1815
    // Predicated region
    $region38: #{tpu_custom_call.1} parent=1 // pred_check
      _
    $region39: #{tpu_custom_call.1} parent=1 // pred_check_branch
      %1822 = sbr.rel (0) target = $region41
    $region40: #{tpu_custom_call.1} parent=1 // pred_region
      %s1824 = ssub.s32 128, 128
      %1825 = vsyncadd [#allocation4], %s1824
      %s1827 = sshll.u32 [#allocation5], 4
      %s1828 = int_to_ptr.vmem [resolvable:$true] %s1827
      %1830 = dma.vmem_to_hbm [thread:$0]  %s1828, 128, %s8, [#allocation4]
    $region41: #{tpu_custom_call.1} parent=1 // pred_fallthru
      _
    // Predicated region
    $region42: #{tpu_custom_call.1} parent=1 // pred_check
      _
    $region43: #{tpu_custom_call.1} parent=1 // pred_check_branch
      %1832 = sbr.rel (0) target = $region45
    $region44: #{tpu_custom_call.1} parent=1 // pred_region
      %1833 = dma.done [#allocation4], 128
    $region45: #{tpu_custom_call.1} parent=1 // pred_fallthru
      _
    %1834 = vsyncpa [#allocation3], 1
    %1835 = vsyncpa [#allocation4], 1

</llo_original>
